<compile_context>
chip_gen: v6e
topology: v6e:2x2x1
jax: 0.10.0
libtpu: 0.0.40
codegen_flags: <defaults>
</compile_context>

<pallas_src>
import functools

import jax
import jax.numpy as jnp
from jax import lax
from jax.experimental import pallas as pl
from jax.experimental.pallas import tpu as pltpu

EPS = 1e-6          # LayerNorm eps (added to std, matching the reference impl)
NEG_INF = -1e9      # masked_fill value used by the reference attention


def _layer_norm(x, gamma, beta):
    # Reference LayerNorm: mean / *unbiased* std over last dim, eps added to std.
    # Single fused pass: mean and sum-of-squares from one sweep over the row.
    d = x.shape[-1]
    s = jnp.sum(x, axis=-1, keepdims=True)
    ss = jnp.sum(x * x, axis=-1, keepdims=True)
    mean = s * (1.0 / d)
    var = jnp.maximum(ss - s * mean, 0.0) * (1.0 / (d - 1))   # unbiased, = sum((x-mean)^2)/(d-1)
    std = jnp.sqrt(var)
    inv = pl.reciprocal(std + EPS, approx=False)
    return gamma * ((x - mean) * inv) + beta


def _dot(a, b):
    return jnp.dot(a, b, preferred_element_type=jnp.float32)


def encoder_layer_kernel(x_ref, mbias_ref,
                         wqkv_ref, bqkv_ref, wo_ref, bo_ref,
                         g1_ref, be1_ref, g2_ref, be2_ref,
                         w1_ref, b1_ref, w2_ref, b2_ref,
                         o_ref, acc_ref, *, num_heads):
    x = x_ref[0]                      # (S, D)
    mask_bias = mbias_ref[0]          # (1, S) additive bias, broadcasts over query rows
    S, D = x.shape
    dk = D // num_heads
    scale = 1.0 / jnp.sqrt(jnp.float32(dk))

    # ---------- sublayer 0: x + MHA(LayerNorm(x)) ----------
    h = _layer_norm(x, g1_ref[0], be1_ref[0])                       # (S, D)
    qkv = _dot(h, wqkv_ref[...]) + bqkv_ref[0]                      # (S, 3D) fused projection
    q = qkv[:, :D] * scale                                          # fold 1/sqrt(dk) once
    k = qkv[:, D:2 * D]
    v = qkv[:, 2 * D:]

    wo = wo_ref[...]                                                # (D, D)
    acc_ref[...] = jnp.zeros_like(acc_ref)                          # (S, D) f32 accumulator
    for hh in range(num_heads):                                     # static head loop
        lo = hh * dk
        qs = q[:, lo:lo + dk]                                       # (S, dk)
        ks = k[:, lo:lo + dk]
        vs = v[:, lo:lo + dk]
        # scores[q, k] = <qs[q], ks[k]>  (scale already folded into q)
        scores = lax.dot_general(qs, ks, (((1,), (1,)), ((), ())),
                                 preferred_element_type=jnp.float32)  # (S, S)
        scores = scores + mask_bias
        m = jnp.max(scores, axis=-1, keepdims=True)
        p = jnp.exp(scores - m)                                     # unnormalized probs
        inv_l = pl.reciprocal(jnp.sum(p, axis=-1, keepdims=True), approx=False)
        head = _dot(p, vs) * inv_l                                  # normalize the (S, dk) output
        acc_ref[...] += _dot(head, wo[lo:lo + dk, :])               # project+accumulate (no concat)
    x1 = x + acc_ref[...] + bo_ref[0]                               # dropout == identity

    # ---------- sublayer 1: x1 + FFN(LayerNorm(x1)) ----------
    h2 = _layer_norm(x1, g2_ref[0], be2_ref[0])
    ff = jnp.maximum(_dot(h2, w1_ref[...]) + b1_ref[0], 0.0)
    ff = _dot(ff, w2_ref[...]) + b2_ref[0]
    o_ref[0] = x1 + ff                                              # dropout == identity


def encoder_layer(x, mask, params, *, num_heads):
    B, S, D = x.shape
    F = params["w1"].shape[1]
    H = num_heads

    # Fused QKV weights/biases and additive mask bias, built once in the wrapper.
    wqkv = jnp.concatenate([params["wq"], params["wk"], params["wv"]], axis=1)   # (D, 3D)
    bqkv = jnp.concatenate([params["bq"], params["bk"], params["bv"]], axis=1)   # (1, 3D)
    mask_bias = jnp.where(mask == 0.0, jnp.float32(NEG_INF), jnp.float32(0.0))   # (B, 1, S)

    def full(shape):
        return pl.BlockSpec(shape, lambda b, _n=len(shape): (0,) * _n)

    in_specs = [
        pl.BlockSpec((1, S, D), lambda b: (b, 0, 0)),   # x
        pl.BlockSpec((1, 1, S), lambda b: (b, 0, 0)),   # mask bias
        full((D, 3 * D)), full((1, 3 * D)),             # wqkv, bqkv
        full((D, D)), full((1, D)),                     # wo, bo
        full((1, D)), full((1, D)),                     # ln1 gamma, beta
        full((1, D)), full((1, D)),                     # ln2 gamma, beta
        full((D, F)), full((1, F)),                     # w1, b1
        full((F, D)), full((1, D)),                     # w2, b2
    ]

    # Advisory cost estimate for the XLA scheduler.
    flops = 2 * B * S * (4 * D * D + 2 * D * F) + 4 * B * S * S * D
    transcendentals = B * H * S * S + 4 * B * S
    weight_bytes = 4 * (4 * D * D + 2 * D * F + 6 * D + F + 3 * D)
    bytes_accessed = weight_bytes + 4 * (2 * B * S * D + B * S)

    kernel = functools.partial(encoder_layer_kernel, num_heads=num_heads)
    return pl.pallas_call(
        kernel,
        out_shape=jax.ShapeDtypeStruct((B, S, D), jnp.float32),
        grid=(B,),
        in_specs=in_specs,
        out_specs=pl.BlockSpec((1, S, D), lambda b: (b, 0, 0)),
        scratch_shapes=[pltpu.VMEM((S, D), jnp.float32)],            # attn-output accumulator
        compiler_params=pltpu.CompilerParams(
            dimension_semantics=("parallel",),                        # batches independent
            vmem_limit_bytes=48 * 1024 * 1024),
        cost_estimate=pl.CostEstimate(flops=flops,
                                      transcendentals=transcendentals,
                                      bytes_accessed=bytes_accessed),
    )(x, mask_bias, wqkv, bqkv,
      params["wo"], params["bo"],
      params["g1"], params["be1"], params["g2"], params["be2"],
      params["w1"], params["b1"], params["w2"], params["b2"])


# ---------- plain-JAX reference (same math, for verification) ----------
def encoder_layer_ref(x, mask, params, *, num_heads):
    B, S, D = x.shape
    dk = D // num_heads

    def ln(z, g, b):
        mean = jnp.mean(z, axis=-1, keepdims=True)
        var = jnp.sum((z - mean) ** 2, axis=-1, keepdims=True) / (D - 1)
        return g * (z - mean) / (jnp.sqrt(var) + EPS) + b

    h = ln(x, params["g1"], params["be1"])
    q = (h @ params["wq"] + params["bq"]).reshape(B, S, num_heads, dk)
    k = (h @ params["wk"] + params["bk"]).reshape(B, S, num_heads, dk)
    v = (h @ params["wv"] + params["bv"]).reshape(B, S, num_heads, dk)
    scores = jnp.einsum("bqhd,bkhd->bhqk", q, k) / jnp.sqrt(jnp.float32(dk))
    m = mask[:, None, :, :]                                  # (B,1,1,S)
    scores = jnp.where(m == 0.0, NEG_INF, scores)
    p = jax.nn.softmax(scores, axis=-1)
    attn = jnp.einsum("bhqk,bkhd->bqhd", p, v).reshape(B, S, D)
    x1 = x + (attn @ params["wo"] + params["bo"])

    h2 = ln(x1, params["g2"], params["be2"])
    ff = jnp.maximum(h2 @ params["w1"] + params["b1"], 0.0) @ params["w2"] + params["b2"]
    return x1 + ff


if __name__ == "__main__":
    B, S, D, H, F = 2, 8, 32, 4, 64

    key = jax.random.PRNGKey(0)
    keys = jax.random.split(key, 12)
    sc = 0.1
    params = {
        "wq": sc * jax.random.normal(keys[0], (D, D), jnp.float32),
        "bq": sc * jax.random.normal(keys[1], (1, D), jnp.float32),
        "wk": sc * jax.random.normal(keys[2], (D, D), jnp.float32),
        "bk": sc * jax.random.normal(keys[3], (1, D), jnp.float32),
        "wv": sc * jax.random.normal(keys[4], (D, D), jnp.float32),
        "bv": sc * jax.random.normal(keys[5], (1, D), jnp.float32),
        "wo": sc * jax.random.normal(keys[6], (D, D), jnp.float32),
        "bo": sc * jax.random.normal(keys[7], (1, D), jnp.float32),
        "g1": jnp.ones((1, D), jnp.float32),
        "be1": jnp.zeros((1, D), jnp.float32),
        "g2": jnp.ones((1, D), jnp.float32),
        "be2": jnp.zeros((1, D), jnp.float32),
        "w1": sc * jax.random.normal(keys[8], (D, F), jnp.float32),
        "b1": sc * jax.random.normal(keys[9], (1, F), jnp.float32),
        "w2": sc * jax.random.normal(keys[10], (F, D), jnp.float32),
        "b2": sc * jax.random.normal(keys[11], (1, D), jnp.float32),
    }

    xkey, mkey = jax.random.split(jax.random.PRNGKey(42))
    x = jax.random.normal(xkey, (B, S, D), jnp.float32)
    # Padding-style mask: last two key positions of batch 1 are masked out.
    mask = jnp.ones((B, 1, S), jnp.float32)
    mask = mask.at[1, 0, S - 2:].set(0.0)

    out = encoder_layer(x, mask, params, num_heads=H)
    out = jax.block_until_ready(out)

    ref = encoder_layer_ref(x, mask, params, num_heads=H)
    assert out.shape == (B, S, D)
    assert jnp.allclose(out, ref, atol=1e-4, rtol=1e-4), "mismatch vs reference"

    print("KERNEL_OK")
</pallas_src>

<mosaic_0001>
module attributes {stable_mosaic.version = 11 : i64} {
  func.func @encoder_layer_kernel(%arg0: i32, %arg1: memref<1x8x32xf32, #tpu.memory_space<vmem>>, %arg2: memref<1x1x8xf32, #tpu.memory_space<vmem>>, %arg3: memref<32x96xf32, #tpu.memory_space<vmem>>, %arg4: memref<1x96xf32, #tpu.memory_space<vmem>>, %arg5: memref<32x32xf32, #tpu.memory_space<vmem>>, %arg6: memref<1x32xf32, #tpu.memory_space<vmem>>, %arg7: memref<1x32xf32, #tpu.memory_space<vmem>>, %arg8: memref<1x32xf32, #tpu.memory_space<vmem>>, %arg9: memref<1x32xf32, #tpu.memory_space<vmem>>, %arg10: memref<1x32xf32, #tpu.memory_space<vmem>>, %arg11: memref<32x64xf32, #tpu.memory_space<vmem>>, %arg12: memref<1x64xf32, #tpu.memory_space<vmem>>, %arg13: memref<64x32xf32, #tpu.memory_space<vmem>>, %arg14: memref<1x32xf32, #tpu.memory_space<vmem>>, %arg15: memref<1x8x32xf32, #tpu.memory_space<vmem>>, %arg16: memref<8x32xf32, #tpu.memory_space<vmem>>) attributes {dimension_semantics = [#tpu.dimension_semantics<parallel>], iteration_bounds = array<i64: 2>, scalar_prefetch = 0 : i64, scratch_operands = 1 : i64, tpu.core_type = #tpu.core_type<tc>, window_params = [{transform_indices = @transform_0, window_bounds = array<i64: 1, 8, 32>}, {transform_indices = @transform_1, window_bounds = array<i64: 1, 1, 8>}, {pipeline_mode = #tpu.pipeline_mode<synchronous>, transform_indices = @transform_2, window_bounds = array<i64: 32, 96>}, {pipeline_mode = #tpu.pipeline_mode<synchronous>, transform_indices = @transform_3, window_bounds = array<i64: 1, 96>}, {pipeline_mode = #tpu.pipeline_mode<synchronous>, transform_indices = @transform_4, window_bounds = array<i64: 32, 32>}, {pipeline_mode = #tpu.pipeline_mode<synchronous>, transform_indices = @transform_5, window_bounds = array<i64: 1, 32>}, {pipeline_mode = #tpu.pipeline_mode<synchronous>, transform_indices = @transform_6, window_bounds = array<i64: 1, 32>}, {pipeline_mode = #tpu.pipeline_mode<synchronous>, transform_indices = @transform_7, window_bounds = array<i64: 1, 32>}, {pipeline_mode = #tpu.pipeline_mode<synchronous>, transform_indices = @transform_8, window_bounds = array<i64: 1, 32>}, {pipeline_mode = #tpu.pipeline_mode<synchronous>, transform_indices = @transform_9, window_bounds = array<i64: 1, 32>}, {pipeline_mode = #tpu.pipeline_mode<synchronous>, transform_indices = @transform_10, window_bounds = array<i64: 32, 64>}, {pipeline_mode = #tpu.pipeline_mode<synchronous>, transform_indices = @transform_11, window_bounds = array<i64: 1, 64>}, {pipeline_mode = #tpu.pipeline_mode<synchronous>, transform_indices = @transform_12, window_bounds = array<i64: 64, 32>}, {pipeline_mode = #tpu.pipeline_mode<synchronous>, transform_indices = @transform_13, window_bounds = array<i64: 1, 32>}, {transform_indices = @transform_14, window_bounds = array<i64: 1, 8, 32>}]} {
    %c0 = arith.constant 0 : index
    %c0_0 = arith.constant 0 : index
    %c0_1 = arith.constant 0 : index
    %0 = vector.load %arg1[%c0, %c0_0, %c0_1] : memref<1x8x32xf32, #tpu.memory_space<vmem>>, vector<1x8x32xf32>
    %1 = vector.shape_cast %0 : vector<1x8x32xf32> to vector<8x32xf32>
    %c0_2 = arith.constant 0 : index
    %c0_3 = arith.constant 0 : index
    %c0_4 = arith.constant 0 : index
    %2 = vector.load %arg2[%c0_2, %c0_3, %c0_4] : memref<1x1x8xf32, #tpu.memory_space<vmem>>, vector<1x1x8xf32>
    %3 = vector.shape_cast %2 : vector<1x1x8xf32> to vector<1x8xf32>
    %cst = arith.constant 8.000000e+00 : f32
    %4 = math.sqrt %cst : f32
    %cst_5 = arith.constant 1.000000e+00 : f32
    %5 = arith.divf %cst_5, %4 : f32
    %c0_6 = arith.constant 0 : index
    %c0_7 = arith.constant 0 : index
    %6 = vector.load %arg7[%c0_6, %c0_7] : memref<1x32xf32, #tpu.memory_space<vmem>>, vector<1x32xf32>
    %7 = vector.shape_cast %6 : vector<1x32xf32> to vector<32xf32>
    %c0_8 = arith.constant 0 : index
    %c0_9 = arith.constant 0 : index
    %8 = vector.load %arg8[%c0_8, %c0_9] : memref<1x32xf32, #tpu.memory_space<vmem>>, vector<1x32xf32>
    %9 = vector.shape_cast %8 : vector<1x32xf32> to vector<32xf32>
    %cst_10 = arith.constant dense<0.000000e+00> : vector<8xf32>
    %10 = vector.multi_reduction <add>, %1, %cst_10 [1] : vector<8x32xf32> to vector<8xf32>
    %11 = vector.shape_cast %10 : vector<8xf32> to vector<8x1xf32>
    %12 = arith.mulf %1, %1 : vector<8x32xf32>
    %cst_11 = arith.constant dense<0.000000e+00> : vector<8xf32>
    %13 = vector.multi_reduction <add>, %12, %cst_11 [1] : vector<8x32xf32> to vector<8xf32>
    %14 = vector.shape_cast %13 : vector<8xf32> to vector<8x1xf32>
    %cst_12 = arith.constant 3.125000e-02 : f32
    %15 = vector.broadcast %cst_12 : f32 to vector<8x1xf32>
    %16 = arith.mulf %11, %15 : vector<8x1xf32>
    %17 = arith.mulf %11, %16 : vector<8x1xf32>
    %18 = arith.subf %14, %17 : vector<8x1xf32>
    %cst_13 = arith.constant 0.000000e+00 : f32
    %19 = vector.broadcast %cst_13 : f32 to vector<8x1xf32>
    %20 = arith.maximumf %18, %19 : vector<8x1xf32>
    %cst_14 = arith.constant 0.0322580636 : f32
    %21 = vector.broadcast %cst_14 : f32 to vector<8x1xf32>
    %22 = arith.mulf %20, %21 : vector<8x1xf32>
    %23 = math.sqrt %22 : vector<8x1xf32>
    %cst_15 = arith.constant 9.99999997E-7 : f32
    %24 = vector.broadcast %cst_15 : f32 to vector<8x1xf32>
    %25 = arith.addf %23, %24 : vector<8x1xf32>
    %26 = tpu.reciprocal %25 : vector<8x1xf32> -> vector<8x1xf32>
    %27 = vector.broadcast %16 : vector<8x1xf32> to vector<8x32xf32>
    %28 = arith.subf %1, %27 : vector<8x32xf32>
    %29 = vector.broadcast %26 : vector<8x1xf32> to vector<8x32xf32>
    %30 = arith.mulf %28, %29 : vector<8x32xf32>
    %31 = vector.shape_cast %7 : vector<32xf32> to vector<1x32xf32>
    %32 = vector.broadcast %31 : vector<1x32xf32> to vector<8x32xf32>
    %33 = arith.mulf %32, %30 : vector<8x32xf32>
    %34 = vector.shape_cast %9 : vector<32xf32> to vector<1x32xf32>
    %35 = vector.broadcast %34 : vector<1x32xf32> to vector<8x32xf32>
    %36 = arith.addf %33, %35 : vector<8x32xf32>
    %c0_16 = arith.constant 0 : index
    %c0_17 = arith.constant 0 : index
    %37 = vector.load %arg3[%c0_16, %c0_17] : memref<32x96xf32, #tpu.memory_space<vmem>>, vector<32x96xf32>
    %cst_18 = arith.constant dense<0.000000e+00> : vector<8x96xf32>
    %38 = tpu.matmul %36, %37, %cst_18 {dimension_numbers = #tpu.dot_dimension_numbers<[1], [0], [0], [1], [0, 0, 1, 1], [], []>} : vector<8x32xf32>, vector<32x96xf32>, vector<8x96xf32> -> vector<8x96xf32>
    %c0_19 = arith.constant 0 : index
    %c0_20 = arith.constant 0 : index
    %39 = vector.load %arg4[%c0_19, %c0_20] : memref<1x96xf32, #tpu.memory_space<vmem>>, vector<1x96xf32>
    %40 = vector.shape_cast %39 : vector<1x96xf32> to vector<96xf32>
    %41 = vector.shape_cast %40 : vector<96xf32> to vector<1x96xf32>
    %42 = vector.broadcast %41 : vector<1x96xf32> to vector<8x96xf32>
    %43 = arith.addf %38, %42 : vector<8x96xf32>
    %44 = vector.extract_strided_slice %43 {offsets = [0, 0], sizes = [8, 32], strides = [1, 1]} : vector<8x96xf32> to vector<8x32xf32>
    %45 = vector.broadcast %5 : f32 to vector<8x32xf32>
    %46 = arith.mulf %44, %45 : vector<8x32xf32>
    %47 = vector.extract_strided_slice %43 {offsets = [0, 32], sizes = [8, 32], strides = [1, 1]} : vector<8x96xf32> to vector<8x32xf32>
    %48 = vector.extract_strided_slice %43 {offsets = [0, 64], sizes = [8, 32], strides = [1, 1]} : vector<8x96xf32> to vector<8x32xf32>
    %c0_21 = arith.constant 0 : index
    %c0_22 = arith.constant 0 : index
    %49 = vector.load %arg5[%c0_21, %c0_22] : memref<32x32xf32, #tpu.memory_space<vmem>>, vector<32x32xf32>
    %cst_23 = arith.constant 0.000000e+00 : f32
    %50 = vector.broadcast %cst_23 : f32 to vector<8x32xf32>
    %c0_24 = arith.constant 0 : index
    %c0_25 = arith.constant 0 : index
    %51 = vector.load %arg16[%c0_24, %c0_25] : memref<8x32xf32, #tpu.memory_space<vmem>>, vector<8x32xf32>
    tpu.vector_store %arg16[%c0_24, %c0_25], %50 {strides = array<i32>} : memref<8x32xf32, #tpu.memory_space<vmem>>, vector<8x32xf32>,
    %52 = vector.extract_strided_slice %46 {offsets = [0, 0], sizes = [8, 8], strides = [1, 1]} : vector<8x32xf32> to vector<8x8xf32>
    %53 = vector.extract_strided_slice %47 {offsets = [0, 0], sizes = [8, 8], strides = [1, 1]} : vector<8x32xf32> to vector<8x8xf32>
    %54 = vector.extract_strided_slice %48 {offsets = [0, 0], sizes = [8, 8], strides = [1, 1]} : vector<8x32xf32> to vector<8x8xf32>
    %cst_26 = arith.constant dense<0.000000e+00> : vector<8x8xf32>
    %55 = tpu.matmul %52, %53, %cst_26 {dimension_numbers = #tpu.dot_dimension_numbers<[1], [1], [0], [0], [0, 0, 1, 0], [], []>} : vector<8x8xf32>, vector<8x8xf32>, vector<8x8xf32> -> vector<8x8xf32>
    %56 = vector.broadcast %3 : vector<1x8xf32> to vector<8x8xf32>
    %57 = arith.addf %55, %56 : vector<8x8xf32>
    %cst_27 = arith.constant dense<0xFF800000> : vector<8xf32>
    %58 = vector.multi_reduction <maximumf>, %57, %cst_27 [1] : vector<8x8xf32> to vector<8xf32>
    %59 = vector.shape_cast %58 : vector<8xf32> to vector<8x1xf32>
    %60 = vector.broadcast %59 : vector<8x1xf32> to vector<8x8xf32>
    %61 = arith.subf %57, %60 : vector<8x8xf32>
    %62 = math.exp %61 : vector<8x8xf32>
    %cst_28 = arith.constant dense<0.000000e+00> : vector<8xf32>
    %63 = vector.multi_reduction <add>, %62, %cst_28 [1] : vector<8x8xf32> to vector<8xf32>
    %64 = vector.shape_cast %63 : vector<8xf32> to vector<8x1xf32>
    %65 = tpu.reciprocal %64 : vector<8x1xf32> -> vector<8x1xf32>
    %cst_29 = arith.constant dense<0.000000e+00> : vector<8x8xf32>
    %66 = tpu.matmul %62, %54, %cst_29 {dimension_numbers = #tpu.dot_dimension_numbers<[1], [0], [0], [1], [0, 0, 1, 1], [], []>} : vector<8x8xf32>, vector<8x8xf32>, vector<8x8xf32> -> vector<8x8xf32>
    %67 = vector.broadcast %65 : vector<8x1xf32> to vector<8x8xf32>
    %68 = arith.mulf %66, %67 : vector<8x8xf32>
    %c0_30 = arith.constant 0 : index
    %c0_31 = arith.constant 0 : index
    %69 = vector.load %arg16[%c0_30, %c0_31] : memref<8x32xf32, #tpu.memory_space<vmem>>, vector<8x32xf32>
    %70 = vector.extract_strided_slice %49 {offsets = [0, 0], sizes = [8, 32], strides = [1, 1]} : vector<32x32xf32> to vector<8x32xf32>
    %cst_32 = arith.constant dense<0.000000e+00> : vector<8x32xf32>
    %71 = tpu.matmul %68, %70, %cst_32 {dimension_numbers = #tpu.dot_dimension_numbers<[1], [0], [0], [1], [0, 0, 1, 1], [], []>} : vector<8x8xf32>, vector<8x32xf32>, vector<8x32xf32> -> vector<8x32xf32>
    %72 = arith.addf %69, %71 : vector<8x32xf32>
    %c0_33 = arith.constant 0 : index
    %c0_34 = arith.constant 0 : index
    %73 = vector.load %arg16[%c0_33, %c0_34] : memref<8x32xf32, #tpu.memory_space<vmem>>, vector<8x32xf32>
    tpu.vector_store %arg16[%c0_33, %c0_34], %72 {strides = array<i32>} : memref<8x32xf32, #tpu.memory_space<vmem>>, vector<8x32xf32>,
    %74 = vector.extract_strided_slice %46 {offsets = [0, 8], sizes = [8, 8], strides = [1, 1]} : vector<8x32xf32> to vector<8x8xf32>
    %75 = vector.extract_strided_slice %47 {offsets = [0, 8], sizes = [8, 8], strides = [1, 1]} : vector<8x32xf32> to vector<8x8xf32>
    %76 = vector.extract_strided_slice %48 {offsets = [0, 8], sizes = [8, 8], strides = [1, 1]} : vector<8x32xf32> to vector<8x8xf32>
    %cst_35 = arith.constant dense<0.000000e+00> : vector<8x8xf32>
    %77 = tpu.matmul %74, %75, %cst_35 {dimension_numbers = #tpu.dot_dimension_numbers<[1], [1], [0], [0], [0, 0, 1, 0], [], []>} : vector<8x8xf32>, vector<8x8xf32>, vector<8x8xf32> -> vector<8x8xf32>
    %78 = vector.broadcast %3 : vector<1x8xf32> to vector<8x8xf32>
    %79 = arith.addf %77, %78 : vector<8x8xf32>
    %cst_36 = arith.constant dense<0xFF800000> : vector<8xf32>
    %80 = vector.multi_reduction <maximumf>, %79, %cst_36 [1] : vector<8x8xf32> to vector<8xf32>
    %81 = vector.shape_cast %80 : vector<8xf32> to vector<8x1xf32>
    %82 = vector.broadcast %81 : vector<8x1xf32> to vector<8x8xf32>
    %83 = arith.subf %79, %82 : vector<8x8xf32>
    %84 = math.exp %83 : vector<8x8xf32>
    %cst_37 = arith.constant dense<0.000000e+00> : vector<8xf32>
    %85 = vector.multi_reduction <add>, %84, %cst_37 [1] : vector<8x8xf32> to vector<8xf32>
    %86 = vector.shape_cast %85 : vector<8xf32> to vector<8x1xf32>
    %87 = tpu.reciprocal %86 : vector<8x1xf32> -> vector<8x1xf32>
    %cst_38 = arith.constant dense<0.000000e+00> : vector<8x8xf32>
    %88 = tpu.matmul %84, %76, %cst_38 {dimension_numbers = #tpu.dot_dimension_numbers<[1], [0], [0], [1], [0, 0, 1, 1], [], []>} : vector<8x8xf32>, vector<8x8xf32>, vector<8x8xf32> -> vector<8x8xf32>
    %89 = vector.broadcast %87 : vector<8x1xf32> to vector<8x8xf32>
    %90 = arith.mulf %88, %89 : vector<8x8xf32>
    %c0_39 = arith.constant 0 : index
    %c0_40 = arith.constant 0 : index
    %91 = vector.load %arg16[%c0_39, %c0_40] : memref<8x32xf32, #tpu.memory_space<vmem>>, vector<8x32xf32>
    %92 = vector.extract_strided_slice %49 {offsets = [8, 0], sizes = [8, 32], strides = [1, 1]} : vector<32x32xf32> to vector<8x32xf32>
    %cst_41 = arith.constant dense<0.000000e+00> : vector<8x32xf32>
    %93 = tpu.matmul %90, %92, %cst_41 {dimension_numbers = #tpu.dot_dimension_numbers<[1], [0], [0], [1], [0, 0, 1, 1], [], []>} : vector<8x8xf32>, vector<8x32xf32>, vector<8x32xf32> -> vector<8x32xf32>
    %94 = arith.addf %91, %93 : vector<8x32xf32>
    %c0_42 = arith.constant 0 : index
    %c0_43 = arith.constant 0 : index
    %95 = vector.load %arg16[%c0_42, %c0_43] : memref<8x32xf32, #tpu.memory_space<vmem>>, vector<8x32xf32>
    tpu.vector_store %arg16[%c0_42, %c0_43], %94 {strides = array<i32>} : memref<8x32xf32, #tpu.memory_space<vmem>>, vector<8x32xf32>,
    %96 = vector.extract_strided_slice %46 {offsets = [0, 16], sizes = [8, 8], strides = [1, 1]} : vector<8x32xf32> to vector<8x8xf32>
    %97 = vector.extract_strided_slice %47 {offsets = [0, 16], sizes = [8, 8], strides = [1, 1]} : vector<8x32xf32> to vector<8x8xf32>
    %98 = vector.extract_strided_slice %48 {offsets = [0, 16], sizes = [8, 8], strides = [1, 1]} : vector<8x32xf32> to vector<8x8xf32>
    %cst_44 = arith.constant dense<0.000000e+00> : vector<8x8xf32>
    %99 = tpu.matmul %96, %97, %cst_44 {dimension_numbers = #tpu.dot_dimension_numbers<[1], [1], [0], [0], [0, 0, 1, 0], [], []>} : vector<8x8xf32>, vector<8x8xf32>, vector<8x8xf32> -> vector<8x8xf32>
    %100 = vector.broadcast %3 : vector<1x8xf32> to vector<8x8xf32>
    %101 = arith.addf %99, %100 : vector<8x8xf32>
    %cst_45 = arith.constant dense<0xFF800000> : vector<8xf32>
    %102 = vector.multi_reduction <maximumf>, %101, %cst_45 [1] : vector<8x8xf32> to vector<8xf32>
    %103 = vector.shape_cast %102 : vector<8xf32> to vector<8x1xf32>
    %104 = vector.broadcast %103 : vector<8x1xf32> to vector<8x8xf32>
    %105 = arith.subf %101, %104 : vector<8x8xf32>
    %106 = math.exp %105 : vector<8x8xf32>
    %cst_46 = arith.constant dense<0.000000e+00> : vector<8xf32>
    %107 = vector.multi_reduction <add>, %106, %cst_46 [1] : vector<8x8xf32> to vector<8xf32>
    %108 = vector.shape_cast %107 : vector<8xf32> to vector<8x1xf32>
    %109 = tpu.reciprocal %108 : vector<8x1xf32> -> vector<8x1xf32>
    %cst_47 = arith.constant dense<0.000000e+00> : vector<8x8xf32>
    %110 = tpu.matmul %106, %98, %cst_47 {dimension_numbers = #tpu.dot_dimension_numbers<[1], [0], [0], [1], [0, 0, 1, 1], [], []>} : vector<8x8xf32>, vector<8x8xf32>, vector<8x8xf32> -> vector<8x8xf32>
    %111 = vector.broadcast %109 : vector<8x1xf32> to vector<8x8xf32>
    %112 = arith.mulf %110, %111 : vector<8x8xf32>
    %c0_48 = arith.constant 0 : index
    %c0_49 = arith.constant 0 : index
    %113 = vector.load %arg16[%c0_48, %c0_49] : memref<8x32xf32, #tpu.memory_space<vmem>>, vector<8x32xf32>
    %114 = vector.extract_strided_slice %49 {offsets = [16, 0], sizes = [8, 32], strides = [1, 1]} : vector<32x32xf32> to vector<8x32xf32>
    %cst_50 = arith.constant dense<0.000000e+00> : vector<8x32xf32>
    %115 = tpu.matmul %112, %114, %cst_50 {dimension_numbers = #tpu.dot_dimension_numbers<[1], [0], [0], [1], [0, 0, 1, 1], [], []>} : vector<8x8xf32>, vector<8x32xf32>, vector<8x32xf32> -> vector<8x32xf32>
    %116 = arith.addf %113, %115 : vector<8x32xf32>
    %c0_51 = arith.constant 0 : index
    %c0_52 = arith.constant 0 : index
    %117 = vector.load %arg16[%c0_51, %c0_52] : memref<8x32xf32, #tpu.memory_space<vmem>>, vector<8x32xf32>
    tpu.vector_store %arg16[%c0_51, %c0_52], %116 {strides = array<i32>} : memref<8x32xf32, #tpu.memory_space<vmem>>, vector<8x32xf32>,
    %118 = vector.extract_strided_slice %46 {offsets = [0, 24], sizes = [8, 8], strides = [1, 1]} : vector<8x32xf32> to vector<8x8xf32>
    %119 = vector.extract_strided_slice %47 {offsets = [0, 24], sizes = [8, 8], strides = [1, 1]} : vector<8x32xf32> to vector<8x8xf32>
    %120 = vector.extract_strided_slice %48 {offsets = [0, 24], sizes = [8, 8], strides = [1, 1]} : vector<8x32xf32> to vector<8x8xf32>
    %cst_53 = arith.constant dense<0.000000e+00> : vector<8x8xf32>
    %121 = tpu.matmul %118, %119, %cst_53 {dimension_numbers = #tpu.dot_dimension_numbers<[1], [1], [0], [0], [0, 0, 1, 0], [], []>} : vector<8x8xf32>, vector<8x8xf32>, vector<8x8xf32> -> vector<8x8xf32>
    %122 = vector.broadcast %3 : vector<1x8xf32> to vector<8x8xf32>
    %123 = arith.addf %121, %122 : vector<8x8xf32>
    %cst_54 = arith.constant dense<0xFF800000> : vector<8xf32>
    %124 = vector.multi_reduction <maximumf>, %123, %cst_54 [1] : vector<8x8xf32> to vector<8xf32>
    %125 = vector.shape_cast %124 : vector<8xf32> to vector<8x1xf32>
    %126 = vector.broadcast %125 : vector<8x1xf32> to vector<8x8xf32>
    %127 = arith.subf %123, %126 : vector<8x8xf32>
    %128 = math.exp %127 : vector<8x8xf32>
    %cst_55 = arith.constant dense<0.000000e+00> : vector<8xf32>
    %129 = vector.multi_reduction <add>, %128, %cst_55 [1] : vector<8x8xf32> to vector<8xf32>
    %130 = vector.shape_cast %129 : vector<8xf32> to vector<8x1xf32>
    %131 = tpu.reciprocal %130 : vector<8x1xf32> -> vector<8x1xf32>
    %cst_56 = arith.constant dense<0.000000e+00> : vector<8x8xf32>
    %132 = tpu.matmul %128, %120, %cst_56 {dimension_numbers = #tpu.dot_dimension_numbers<[1], [0], [0], [1], [0, 0, 1, 1], [], []>} : vector<8x8xf32>, vector<8x8xf32>, vector<8x8xf32> -> vector<8x8xf32>
    %133 = vector.broadcast %131 : vector<8x1xf32> to vector<8x8xf32>
    %134 = arith.mulf %132, %133 : vector<8x8xf32>
    %c0_57 = arith.constant 0 : index
    %c0_58 = arith.constant 0 : index
    %135 = vector.load %arg16[%c0_57, %c0_58] : memref<8x32xf32, #tpu.memory_space<vmem>>, vector<8x32xf32>
    %136 = vector.extract_strided_slice %49 {offsets = [24, 0], sizes = [8, 32], strides = [1, 1]} : vector<32x32xf32> to vector<8x32xf32>
    %cst_59 = arith.constant dense<0.000000e+00> : vector<8x32xf32>
    %137 = tpu.matmul %134, %136, %cst_59 {dimension_numbers = #tpu.dot_dimension_numbers<[1], [0], [0], [1], [0, 0, 1, 1], [], []>} : vector<8x8xf32>, vector<8x32xf32>, vector<8x32xf32> -> vector<8x32xf32>
    %138 = arith.addf %135, %137 : vector<8x32xf32>
    %c0_60 = arith.constant 0 : index
    %c0_61 = arith.constant 0 : index
    %139 = vector.load %arg16[%c0_60, %c0_61] : memref<8x32xf32, #tpu.memory_space<vmem>>, vector<8x32xf32>
    tpu.vector_store %arg16[%c0_60, %c0_61], %138 {strides = array<i32>} : memref<8x32xf32, #tpu.memory_space<vmem>>, vector<8x32xf32>,
    %c0_62 = arith.constant 0 : index
    %c0_63 = arith.constant 0 : index
    %140 = vector.load %arg16[%c0_62, %c0_63] : memref<8x32xf32, #tpu.memory_space<vmem>>, vector<8x32xf32>
    %141 = arith.addf %1, %140 : vector<8x32xf32>
    %c0_64 = arith.constant 0 : index
    %c0_65 = arith.constant 0 : index
    %142 = vector.load %arg6[%c0_64, %c0_65] : memref<1x32xf32, #tpu.memory_space<vmem>>, vector<1x32xf32>
    %143 = vector.shape_cast %142 : vector<1x32xf32> to vector<32xf32>
    %144 = vector.shape_cast %143 : vector<32xf32> to vector<1x32xf32>
    %145 = vector.broadcast %144 : vector<1x32xf32> to vector<8x32xf32>
    %146 = arith.addf %141, %145 : vector<8x32xf32>
    %c0_66 = arith.constant 0 : index
    %c0_67 = arith.constant 0 : index
    %147 = vector.load %arg9[%c0_66, %c0_67] : memref<1x32xf32, #tpu.memory_space<vmem>>, vector<1x32xf32>
    %148 = vector.shape_cast %147 : vector<1x32xf32> to vector<32xf32>
    %c0_68 = arith.constant 0 : index
    %c0_69 = arith.constant 0 : index
    %149 = vector.load %arg10[%c0_68, %c0_69] : memref<1x32xf32, #tpu.memory_space<vmem>>, vector<1x32xf32>
    %150 = vector.shape_cast %149 : vector<1x32xf32> to vector<32xf32>
    %cst_70 = arith.constant dense<0.000000e+00> : vector<8xf32>
    %151 = vector.multi_reduction <add>, %146, %cst_70 [1] : vector<8x32xf32> to vector<8xf32>
    %152 = vector.shape_cast %151 : vector<8xf32> to vector<8x1xf32>
    %153 = arith.mulf %146, %146 : vector<8x32xf32>
    %cst_71 = arith.constant dense<0.000000e+00> : vector<8xf32>
    %154 = vector.multi_reduction <add>, %153, %cst_71 [1] : vector<8x32xf32> to vector<8xf32>
    %155 = vector.shape_cast %154 : vector<8xf32> to vector<8x1xf32>
    %cst_72 = arith.constant 3.125000e-02 : f32
    %156 = vector.broadcast %cst_72 : f32 to vector<8x1xf32>
    %157 = arith.mulf %152, %156 : vector<8x1xf32>
    %158 = arith.mulf %152, %157 : vector<8x1xf32>
    %159 = arith.subf %155, %158 : vector<8x1xf32>
    %cst_73 = arith.constant 0.000000e+00 : f32
    %160 = vector.broadcast %cst_73 : f32 to vector<8x1xf32>
    %161 = arith.maximumf %159, %160 : vector<8x1xf32>
    %cst_74 = arith.constant 0.0322580636 : f32
    %162 = vector.broadcast %cst_74 : f32 to vector<8x1xf32>
    %163 = arith.mulf %161, %162 : vector<8x1xf32>
    %164 = math.sqrt %163 : vector<8x1xf32>
    %cst_75 = arith.constant 9.99999997E-7 : f32
    %165 = vector.broadcast %cst_75 : f32 to vector<8x1xf32>
    %166 = arith.addf %164, %165 : vector<8x1xf32>
    %167 = tpu.reciprocal %166 : vector<8x1xf32> -> vector<8x1xf32>
    %168 = vector.broadcast %157 : vector<8x1xf32> to vector<8x32xf32>
    %169 = arith.subf %146, %168 : vector<8x32xf32>
    %170 = vector.broadcast %167 : vector<8x1xf32> to vector<8x32xf32>
    %171 = arith.mulf %169, %170 : vector<8x32xf32>
    %172 = vector.shape_cast %148 : vector<32xf32> to vector<1x32xf32>
    %173 = vector.broadcast %172 : vector<1x32xf32> to vector<8x32xf32>
    %174 = arith.mulf %173, %171 : vector<8x32xf32>
    %175 = vector.shape_cast %150 : vector<32xf32> to vector<1x32xf32>
    %176 = vector.broadcast %175 : vector<1x32xf32> to vector<8x32xf32>
    %177 = arith.addf %174, %176 : vector<8x32xf32>
    %c0_76 = arith.constant 0 : index
    %c0_77 = arith.constant 0 : index
    %178 = vector.load %arg11[%c0_76, %c0_77] : memref<32x64xf32, #tpu.memory_space<vmem>>, vector<32x64xf32>
    %cst_78 = arith.constant dense<0.000000e+00> : vector<8x64xf32>
    %179 = tpu.matmul %177, %178, %cst_78 {dimension_numbers = #tpu.dot_dimension_numbers<[1], [0], [0], [1], [0, 0, 1, 1], [], []>} : vector<8x32xf32>, vector<32x64xf32>, vector<8x64xf32> -> vector<8x64xf32>
    %c0_79 = arith.constant 0 : index
    %c0_80 = arith.constant 0 : index
    %180 = vector.load %arg12[%c0_79, %c0_80] : memref<1x64xf32, #tpu.memory_space<vmem>>, vector<1x64xf32>
    %181 = vector.shape_cast %180 : vector<1x64xf32> to vector<64xf32>
    %182 = vector.shape_cast %181 : vector<64xf32> to vector<1x64xf32>
    %183 = vector.broadcast %182 : vector<1x64xf32> to vector<8x64xf32>
    %184 = arith.addf %179, %183 : vector<8x64xf32>
    %cst_81 = arith.constant 0.000000e+00 : f32
    %185 = vector.broadcast %cst_81 : f32 to vector<8x64xf32>
    %186 = arith.maximumf %184, %185 : vector<8x64xf32>
    %c0_82 = arith.constant 0 : index
    %c0_83 = arith.constant 0 : index
    %187 = vector.load %arg13[%c0_82, %c0_83] : memref<64x32xf32, #tpu.memory_space<vmem>>, vector<64x32xf32>
    %cst_84 = arith.constant dense<0.000000e+00> : vector<8x32xf32>
    %188 = tpu.matmul %186, %187, %cst_84 {dimension_numbers = #tpu.dot_dimension_numbers<[1], [0], [0], [1], [0, 0, 1, 1], [], []>} : vector<8x64xf32>, vector<64x32xf32>, vector<8x32xf32> -> vector<8x32xf32>
    %c0_85 = arith.constant 0 : index
    %c0_86 = arith.constant 0 : index
    %189 = vector.load %arg14[%c0_85, %c0_86] : memref<1x32xf32, #tpu.memory_space<vmem>>, vector<1x32xf32>
    %190 = vector.shape_cast %189 : vector<1x32xf32> to vector<32xf32>
    %191 = vector.shape_cast %190 : vector<32xf32> to vector<1x32xf32>
    %192 = vector.broadcast %191 : vector<1x32xf32> to vector<8x32xf32>
    %193 = arith.addf %188, %192 : vector<8x32xf32>
    %194 = arith.addf %146, %193 : vector<8x32xf32>
    %c0_87 = arith.constant 0 : index
    %c0_88 = arith.constant 0 : index
    %c0_89 = arith.constant 0 : index
    %195 = vector.load %arg15[%c0_87, %c0_88, %c0_89] : memref<1x8x32xf32, #tpu.memory_space<vmem>>, vector<1x8x32xf32>
    %196 = vector.shape_cast %195 : vector<1x8x32xf32> to vector<8x32xf32>
    %197 = vector.shape_cast %194 : vector<8x32xf32> to vector<1x8x32xf32>
    tpu.vector_store %arg15[%c0_87, %c0_88, %c0_89], %197 {strides = array<i32>} : memref<1x8x32xf32, #tpu.memory_space<vmem>>, vector<1x8x32xf32>,
    return
  }
  func.func @transform_0(%arg0: i32) -> (i32, i32, i32) {
    %c0_i32 = arith.constant 0 : i32
    %c0_i32_0 = arith.constant 0 : i32
    %c0_i32_1 = arith.constant 0 : i32
    return %arg0, %c0_i32, %c0_i32_0 : i32, i32, i32
  }
  func.func @transform_1(%arg0: i32) -> (i32, i32, i32) {
    %c0_i32 = arith.constant 0 : i32
    %c0_i32_0 = arith.constant 0 : i32
    %c0_i32_1 = arith.constant 0 : i32
    return %arg0, %c0_i32, %c0_i32_0 : i32, i32, i32
  }
  func.func @transform_2(%arg0: i32) -> (i32, i32) {
    %c0_i32 = arith.constant 0 : i32
    %c0_i32_0 = arith.constant 0 : i32
    %c0_i32_1 = arith.constant 0 : i32
    return %c0_i32, %c0_i32_0 : i32, i32
  }
  func.func @transform_3(%arg0: i32) -> (i32, i32) {
    %c0_i32 = arith.constant 0 : i32
    %c0_i32_0 = arith.constant 0 : i32
    %c0_i32_1 = arith.constant 0 : i32
    return %c0_i32, %c0_i32_0 : i32, i32
  }
  func.func @transform_4(%arg0: i32) -> (i32, i32) {
    %c0_i32 = arith.constant 0 : i32
    %c0_i32_0 = arith.constant 0 : i32
    %c0_i32_1 = arith.constant 0 : i32
    return %c0_i32, %c0_i32_0 : i32, i32
  }
  func.func @transform_5(%arg0: i32) -> (i32, i32) {
    %c0_i32 = arith.constant 0 : i32
    %c0_i32_0 = arith.constant 0 : i32
    %c0_i32_1 = arith.constant 0 : i32
    return %c0_i32, %c0_i32_0 : i32, i32
  }
  func.func @transform_6(%arg0: i32) -> (i32, i32) {
    %c0_i32 = arith.constant 0 : i32
    %c0_i32_0 = arith.constant 0 : i32
    %c0_i32_1 = arith.constant 0 : i32
    return %c0_i32, %c0_i32_0 : i32, i32
  }
  func.func @transform_7(%arg0: i32) -> (i32, i32) {
    %c0_i32 = arith.constant 0 : i32
    %c0_i32_0 = arith.constant 0 : i32
    %c0_i32_1 = arith.constant 0 : i32
    return %c0_i32, %c0_i32_0 : i32, i32
  }
  func.func @transform_8(%arg0: i32) -> (i32, i32) {
    %c0_i32 = arith.constant 0 : i32
    %c0_i32_0 = arith.constant 0 : i32
    %c0_i32_1 = arith.constant 0 : i32
    return %c0_i32, %c0_i32_0 : i32, i32
  }
  func.func @transform_9(%arg0: i32) -> (i32, i32) {
    %c0_i32 = arith.constant 0 : i32
    %c0_i32_0 = arith.constant 0 : i32
    %c0_i32_1 = arith.constant 0 : i32
    return %c0_i32, %c0_i32_0 : i32, i32
  }
  func.func @transform_10(%arg0: i32) -> (i32, i32) {
    %c0_i32 = arith.constant 0 : i32
    %c0_i32_0 = arith.constant 0 : i32
    %c0_i32_1 = arith.constant 0 : i32
    return %c0_i32, %c0_i32_0 : i32, i32
  }
  func.func @transform_11(%arg0: i32) -> (i32, i32) {
    %c0_i32 = arith.constant 0 : i32
    %c0_i32_0 = arith.constant 0 : i32
    %c0_i32_1 = arith.constant 0 : i32
    return %c0_i32, %c0_i32_0 : i32, i32
  }
  func.func @transform_12(%arg0: i32) -> (i32, i32) {
    %c0_i32 = arith.constant 0 : i32
    %c0_i32_0 = arith.constant 0 : i32
    %c0_i32_1 = arith.constant 0 : i32
    return %c0_i32, %c0_i32_0 : i32, i32
  }
  func.func @transform_13(%arg0: i32) -> (i32, i32) {
    %c0_i32 = arith.constant 0 : i32
    %c0_i32_0 = arith.constant 0 : i32
    %c0_i32_1 = arith.constant 0 : i32
    return %c0_i32, %c0_i32_0 : i32, i32
  }
  func.func @transform_14(%arg0: i32) -> (i32, i32, i32) {
    %c0_i32 = arith.constant 0 : i32
    %c0_i32_0 = arith.constant 0 : i32
    %c0_i32_1 = arith.constant 0 : i32
    return %arg0, %c0_i32, %c0_i32_0 : i32, i32, i32
  }
}

</mosaic_0001>

<llo_original>
// kernel: tpu_custom_call.1
$region0: #{tpu_custom_call.1}
  #allocation0 [shape = 'u32[]', space=smem, size = 0x4, offset = 0x4, fixed_abs, tag = 'smem constant byte address 0x4 - core index']
  #allocation1 [shape = 'u32[144,128]{1,0:T(1,128)}', space=vmem, size = 0x12000, scoped, tag = 'internal scratch']
  #allocation2 [shape = 'f32[8,32]{1,0:T(8,128)}', space=vmem, size = 0x1000, scoped, tag = 'scratch operand']
  %s0 = inlined_call_operand.hbm [shape: f32[2,8,32], index: 0, kind: input, shape index: {}]
  %s1 = inlined_call_operand.hbm [shape: f32[2,1,8], index: 1, kind: input, shape index: {}]
  %s2 = inlined_call_operand.vmem [shape: f32[32,96], index: 2, kind: input, shape index: {}]
  %s3 = inlined_call_operand.vmem [shape: f32[1,96], index: 3, kind: input, shape index: {}]
  %s4 = inlined_call_operand.vmem [shape: f32[32,32], index: 4, kind: input, shape index: {}]
  %s5 = inlined_call_operand.vmem [shape: f32[1,32], index: 5, kind: input, shape index: {}]
  %s6 = inlined_call_operand.vmem [shape: f32[1,32], index: 6, kind: input, shape index: {}]
  %s7 = inlined_call_operand.vmem [shape: f32[1,32], index: 7, kind: input, shape index: {}]
  %s8 = inlined_call_operand.vmem [shape: f32[1,32], index: 8, kind: input, shape index: {}]
  %s9 = inlined_call_operand.vmem [shape: f32[1,32], index: 9, kind: input, shape index: {}]
  %s10 = inlined_call_operand.vmem [shape: f32[32,64], index: 10, kind: input, shape index: {}]
  %s11 = inlined_call_operand.vmem [shape: f32[1,64], index: 11, kind: input, shape index: {}]
  %s12 = inlined_call_operand.vmem [shape: f32[64,32], index: 12, kind: input, shape index: {}]
  %s13 = inlined_call_operand.vmem [shape: f32[1,32], index: 13, kind: input, shape index: {}]
  %s14 = inlined_call_operand.hbm [shape: f32[2,8,32], index: 14, kind: output, shape index: {}]
  %s15 = sld [smem:[#allocation0]]
  $region97: #{tpu_custom_call.1} parent=0
    _
  %s17 = ssub.s32 1, %s15
  %s18 = scalar_select 0, %s17, %s15
  $region1: #{tpu_custom_call.1} parent=0
    #allocation3 [shape = 'u8[8192]{0}', space=vmem, size = 0x2000, scoped, tag = 'input window, operand 0']
    #allocation4 [shape = 's32[2]{0}', space=sflag, size = 0x8, scoped, tag = 'scoped memory for tpu_custom_call.1']
    #allocation5 [shape = 's32[2]{0}', space=sflag, size = 0x8, scoped, tag = 'scoped memory for tpu_custom_call.1']
    #allocation6 [shape = 'u8[1024]{0}', space=vmem, size = 0x400, scoped, tag = 'input window, operand 1']
    #allocation7 [shape = 's32[2]{0}', space=sflag, size = 0x8, scoped, tag = 'scoped memory for tpu_custom_call.1']
    #allocation8 [shape = 'u8[8192]{0}', space=vmem, size = 0x2000, scoped, tag = 'output window, operand 0']
    %19 = vsyncpa [#allocation4], 0
    %s20 = scalar_lea.sflag [#allocation4], 1
    %21 = vsyncpa %s20, 0
    %22 = vsyncpa [#allocation7], 0
    %s23 = scalar_lea.sflag [#allocation7], 1
    %24 = vsyncpa %s23, 0
    %25 = vsyncpa [#allocation5], 0
    %s26 = scalar_lea.sflag [#allocation5], 1
    %27 = vsyncpa %s26, 0
    loop: start=0, step=1, limit=4
    $region2: #{tpu_custom_call.1} parent=1 // loop_pre_header
      _
    $region3: #{tpu_custom_call.1} parent=1 // loop_header
      %s29 = sphi 0, %s33
      %p30 = scmp.ge.s32.totalorder %s29, 4
      %s39 = sphi 0, %s41
      %s42 = sphi 0, %s39
      %s43 = sphi 0, %s42
      %s59 = sphi 0, %s43
      %s65 = sphi 0, %s67
      %s68 = sphi 0, %s65
      %s69 = sphi 0, %s68
      %s85 = sphi 0, %s69
      %s89 = sphi 0, %s89
      %s91 = sphi 0, %s89
      %s92 = sphi 0, %s91
      %s106 = sphi 0, %s92
      %s110 = sphi 0, %s110
      %s112 = sphi 0, %s110
      %s113 = sphi 0, %s112
      %s127 = sphi 0, %s113
      %s131 = sphi 0, %s131
      %s133 = sphi 0, %s131
      %s134 = sphi 0, %s133
      %s148 = sphi 0, %s134
      %s152 = sphi 0, %s152
      %s154 = sphi 0, %s152
      %s155 = sphi 0, %s154
      %s169 = sphi 0, %s155
      %s173 = sphi 0, %s173
      %s175 = sphi 0, %s173
      %s176 = sphi 0, %s175
      %s190 = sphi 0, %s176
      %s194 = sphi 0, %s194
      %s196 = sphi 0, %s194
      %s197 = sphi 0, %s196
      %s211 = sphi 0, %s197
      %s215 = sphi 0, %s215
      %s217 = sphi 0, %s215
      %s218 = sphi 0, %s217
      %s232 = sphi 0, %s218
      %s236 = sphi 0, %s236
      %s238 = sphi 0, %s236
      %s239 = sphi 0, %s238
      %s253 = sphi 0, %s239
      %s257 = sphi 0, %s257
      %s259 = sphi 0, %s257
      %s260 = sphi 0, %s259
      %s274 = sphi 0, %s260
      %s278 = sphi 0, %s278
      %s280 = sphi 0, %s278
      %s281 = sphi 0, %s280
      %s295 = sphi 0, %s281
      %s299 = sphi 0, %s299
      %s301 = sphi 0, %s299
      %s302 = sphi 0, %s301
      %s316 = sphi 0, %s302
      %s320 = sphi 0, %s320
      %s322 = sphi 0, %s320
      %s323 = sphi 0, %s322
      %s337 = sphi 0, %s323
      %s343 = sphi 0, %s345
      %s346 = sphi 0, %s343
      %s347 = sphi 0, %s346
      %s363 = sphi 0, %s347
    $region4: #{tpu_custom_call.1} parent=1 // loop_header_branch
      %32 = sbr.rel (%p30) target = $region8
    $region5: #{tpu_custom_call.1} parent=1 // loop_body
      %s34 = ssub.s32 %s29, 1
      %s35 = ssub.s32 %s29, 2
      %s36 = sadd.s32 %s29, 1
      %s37 = ssub.s32 %s29, %s36
      %p38 = scmp.eq.s32.totalorder %s37, 0
      %s40 = sadd.s32 %s39, 1
      %s41 = scalar_select %p38, %s39, %s40
      %p44 = pneg %p38
      %p45 = scmp.eq.s32.totalorder %s29, 1
      %p46 = por %p44, %p45
      %p47 = scmp.ne.s32.totalorder %s39, %s42
      %p48 = scmp.eq.s32.totalorder %s29, 0
      %p49 = por %p47, %p48
      %p50 = scmp.ne.s32.totalorder %s39, %s42
      %p51 = scmp.eq.s32.totalorder %s34, 1
      %p52 = por %p50, %p51
      %p53 = scmp.ne.s32.totalorder %s42, %s43
      %p54 = scmp.eq.s32.totalorder %s34, 0
      %p55 = por %p53, %p54
      %p56 = scmp.ne.s32.totalorder %s42, %s43
      %p57 = scmp.eq.s32.totalorder %s35, 1
      %p58 = por %p56, %p57
      %p60 = scmp.ne.s32.totalorder %s43, %s59
      %p61 = scmp.eq.s32.totalorder %s35, 0
      %p62 = por %p60, %p61
      %s63 = ssub.s32 %s29, %s36
      %p64 = scmp.eq.s32.totalorder %s63, 0
      %s66 = sadd.s32 %s65, 1
      %s67 = scalar_select %p64, %s65, %s66
      %p70 = pneg %p64
      %p71 = scmp.eq.s32.totalorder %s29, 1
      %p72 = por %p70, %p71
      %p73 = scmp.ne.s32.totalorder %s65, %s68
      %p74 = scmp.eq.s32.totalorder %s29, 0
      %p75 = por %p73, %p74
      %p76 = scmp.ne.s32.totalorder %s65, %s68
      %p77 = scmp.eq.s32.totalorder %s34, 1
      %p78 = por %p76, %p77
      %p79 = scmp.ne.s32.totalorder %s68, %s69
      %p80 = scmp.eq.s32.totalorder %s34, 0
      %p81 = por %p79, %p80
      %p82 = scmp.ne.s32.totalorder %s68, %s69
      %p83 = scmp.eq.s32.totalorder %s35, 1
      %p84 = por %p82, %p83
      %p86 = scmp.ne.s32.totalorder %s69, %s85
      %p87 = scmp.eq.s32.totalorder %s35, 0
      %p88 = por %p86, %p87
      %s90 = sadd.s32 %s89, 1
      %p93 = scmp.eq.s32.totalorder %s29, 1
      %p94 = scmp.ne.s32.totalorder %s89, %s91
      %p95 = scmp.eq.s32.totalorder %s29, 0
      %p96 = por %p94, %p95
      %p97 = scmp.ne.s32.totalorder %s89, %s91
      %p98 = scmp.eq.s32.totalorder %s34, 1
      %p99 = por %p97, %p98
      %p100 = scmp.ne.s32.totalorder %s91, %s92
      %p101 = scmp.eq.s32.totalorder %s34, 0
      %p102 = por %p100, %p101
      %p103 = scmp.ne.s32.totalorder %s91, %s92
      %p104 = scmp.eq.s32.totalorder %s35, 1
      %p105 = por %p103, %p104
      %p107 = scmp.ne.s32.totalorder %s92, %s106
      %p108 = scmp.eq.s32.totalorder %s35, 0
      %p109 = por %p107, %p108
      %s111 = sadd.s32 %s110, 1
      %p114 = scmp.eq.s32.totalorder %s29, 1
      %p115 = scmp.ne.s32.totalorder %s110, %s112
      %p116 = scmp.eq.s32.totalorder %s29, 0
      %p117 = por %p115, %p116
      %p118 = scmp.ne.s32.totalorder %s110, %s112
      %p119 = scmp.eq.s32.totalorder %s34, 1
      %p120 = por %p118, %p119
      %p121 = scmp.ne.s32.totalorder %s112, %s113
      %p122 = scmp.eq.s32.totalorder %s34, 0
      %p123 = por %p121, %p122
      %p124 = scmp.ne.s32.totalorder %s112, %s113
      %p125 = scmp.eq.s32.totalorder %s35, 1
      %p126 = por %p124, %p125
      %p128 = scmp.ne.s32.totalorder %s113, %s127
      %p129 = scmp.eq.s32.totalorder %s35, 0
      %p130 = por %p128, %p129
      %s132 = sadd.s32 %s131, 1
      %p135 = scmp.eq.s32.totalorder %s29, 1
      %p136 = scmp.ne.s32.totalorder %s131, %s133
      %p137 = scmp.eq.s32.totalorder %s29, 0
      %p138 = por %p136, %p137
      %p139 = scmp.ne.s32.totalorder %s131, %s133
      %p140 = scmp.eq.s32.totalorder %s34, 1
      %p141 = por %p139, %p140
      %p142 = scmp.ne.s32.totalorder %s133, %s134
      %p143 = scmp.eq.s32.totalorder %s34, 0
      %p144 = por %p142, %p143
      %p145 = scmp.ne.s32.totalorder %s133, %s134
      %p146 = scmp.eq.s32.totalorder %s35, 1
      %p147 = por %p145, %p146
      %p149 = scmp.ne.s32.totalorder %s134, %s148
      %p150 = scmp.eq.s32.totalorder %s35, 0
      %p151 = por %p149, %p150
      %s153 = sadd.s32 %s152, 1
      %p156 = scmp.eq.s32.totalorder %s29, 1
      %p157 = scmp.ne.s32.totalorder %s152, %s154
      %p158 = scmp.eq.s32.totalorder %s29, 0
      %p159 = por %p157, %p158
      %p160 = scmp.ne.s32.totalorder %s152, %s154
      %p161 = scmp.eq.s32.totalorder %s34, 1
      %p162 = por %p160, %p161
      %p163 = scmp.ne.s32.totalorder %s154, %s155
      %p164 = scmp.eq.s32.totalorder %s34, 0
      %p165 = por %p163, %p164
      %p166 = scmp.ne.s32.totalorder %s154, %s155
      %p167 = scmp.eq.s32.totalorder %s35, 1
      %p168 = por %p166, %p167
      %p170 = scmp.ne.s32.totalorder %s155, %s169
      %p171 = scmp.eq.s32.totalorder %s35, 0
      %p172 = por %p170, %p171
      %s174 = sadd.s32 %s173, 1
      %p177 = scmp.eq.s32.totalorder %s29, 1
      %p178 = scmp.ne.s32.totalorder %s173, %s175
      %p179 = scmp.eq.s32.totalorder %s29, 0
      %p180 = por %p178, %p179
      %p181 = scmp.ne.s32.totalorder %s173, %s175
      %p182 = scmp.eq.s32.totalorder %s34, 1
      %p183 = por %p181, %p182
      %p184 = scmp.ne.s32.totalorder %s175, %s176
      %p185 = scmp.eq.s32.totalorder %s34, 0
      %p186 = por %p184, %p185
      %p187 = scmp.ne.s32.totalorder %s175, %s176
      %p188 = scmp.eq.s32.totalorder %s35, 1
      %p189 = por %p187, %p188
      %p191 = scmp.ne.s32.totalorder %s176, %s190
      %p192 = scmp.eq.s32.totalorder %s35, 0
      %p193 = por %p191, %p192
      %s195 = sadd.s32 %s194, 1
      %p198 = scmp.eq.s32.totalorder %s29, 1
      %p199 = scmp.ne.s32.totalorder %s194, %s196
      %p200 = scmp.eq.s32.totalorder %s29, 0
      %p201 = por %p199, %p200
      %p202 = scmp.ne.s32.totalorder %s194, %s196
      %p203 = scmp.eq.s32.totalorder %s34, 1
      %p204 = por %p202, %p203
      %p205 = scmp.ne.s32.totalorder %s196, %s197
      %p206 = scmp.eq.s32.totalorder %s34, 0
      %p207 = por %p205, %p206
      %p208 = scmp.ne.s32.totalorder %s196, %s197
      %p209 = scmp.eq.s32.totalorder %s35, 1
      %p210 = por %p208, %p209
      %p212 = scmp.ne.s32.totalorder %s197, %s211
      %p213 = scmp.eq.s32.totalorder %s35, 0
      %p214 = por %p212, %p213
      %s216 = sadd.s32 %s215, 1
      %p219 = scmp.eq.s32.totalorder %s29, 1
      %p220 = scmp.ne.s32.totalorder %s215, %s217
      %p221 = scmp.eq.s32.totalorder %s29, 0
      %p222 = por %p220, %p221
      %p223 = scmp.ne.s32.totalorder %s215, %s217
      %p224 = scmp.eq.s32.totalorder %s34, 1
      %p225 = por %p223, %p224
      %p226 = scmp.ne.s32.totalorder %s217, %s218
      %p227 = scmp.eq.s32.totalorder %s34, 0
      %p228 = por %p226, %p227
      %p229 = scmp.ne.s32.totalorder %s217, %s218
      %p230 = scmp.eq.s32.totalorder %s35, 1
      %p231 = por %p229, %p230
      %p233 = scmp.ne.s32.totalorder %s218, %s232
      %p234 = scmp.eq.s32.totalorder %s35, 0
      %p235 = por %p233, %p234
      %s237 = sadd.s32 %s236, 1
      %p240 = scmp.eq.s32.totalorder %s29, 1
      %p241 = scmp.ne.s32.totalorder %s236, %s238
      %p242 = scmp.eq.s32.totalorder %s29, 0
      %p243 = por %p241, %p242
      %p244 = scmp.ne.s32.totalorder %s236, %s238
      %p245 = scmp.eq.s32.totalorder %s34, 1
      %p246 = por %p244, %p245
      %p247 = scmp.ne.s32.totalorder %s238, %s239
      %p248 = scmp.eq.s32.totalorder %s34, 0
      %p249 = por %p247, %p248
      %p250 = scmp.ne.s32.totalorder %s238, %s239
      %p251 = scmp.eq.s32.totalorder %s35, 1
      %p252 = por %p250, %p251
      %p254 = scmp.ne.s32.totalorder %s239, %s253
      %p255 = scmp.eq.s32.totalorder %s35, 0
      %p256 = por %p254, %p255
      %s258 = sadd.s32 %s257, 1
      %p261 = scmp.eq.s32.totalorder %s29, 1
      %p262 = scmp.ne.s32.totalorder %s257, %s259
      %p263 = scmp.eq.s32.totalorder %s29, 0
      %p264 = por %p262, %p263
      %p265 = scmp.ne.s32.totalorder %s257, %s259
      %p266 = scmp.eq.s32.totalorder %s34, 1
      %p267 = por %p265, %p266
      %p268 = scmp.ne.s32.totalorder %s259, %s260
      %p269 = scmp.eq.s32.totalorder %s34, 0
      %p270 = por %p268, %p269
      %p271 = scmp.ne.s32.totalorder %s259, %s260
      %p272 = scmp.eq.s32.totalorder %s35, 1
      %p273 = por %p271, %p272
      %p275 = scmp.ne.s32.totalorder %s260, %s274
      %p276 = scmp.eq.s32.totalorder %s35, 0
      %p277 = por %p275, %p276
      %s279 = sadd.s32 %s278, 1
      %p282 = scmp.eq.s32.totalorder %s29, 1
      %p283 = scmp.ne.s32.totalorder %s278, %s280
      %p284 = scmp.eq.s32.totalorder %s29, 0
      %p285 = por %p283, %p284
      %p286 = scmp.ne.s32.totalorder %s278, %s280
      %p287 = scmp.eq.s32.totalorder %s34, 1
      %p288 = por %p286, %p287
      %p289 = scmp.ne.s32.totalorder %s280, %s281
      %p290 = scmp.eq.s32.totalorder %s34, 0
      %p291 = por %p289, %p290
      %p292 = scmp.ne.s32.totalorder %s280, %s281
      %p293 = scmp.eq.s32.totalorder %s35, 1
      %p294 = por %p292, %p293
      %p296 = scmp.ne.s32.totalorder %s281, %s295
      %p297 = scmp.eq.s32.totalorder %s35, 0
      %p298 = por %p296, %p297
      %s300 = sadd.s32 %s299, 1
      %p303 = scmp.eq.s32.totalorder %s29, 1
      %p304 = scmp.ne.s32.totalorder %s299, %s301
      %p305 = scmp.eq.s32.totalorder %s29, 0
      %p306 = por %p304, %p305
      %p307 = scmp.ne.s32.totalorder %s299, %s301
      %p308 = scmp.eq.s32.totalorder %s34, 1
      %p309 = por %p307, %p308
      %p310 = scmp.ne.s32.totalorder %s301, %s302
      %p311 = scmp.eq.s32.totalorder %s34, 0
      %p312 = por %p310, %p311
      %p313 = scmp.ne.s32.totalorder %s301, %s302
      %p314 = scmp.eq.s32.totalorder %s35, 1
      %p315 = por %p313, %p314
      %p317 = scmp.ne.s32.totalorder %s302, %s316
      %p318 = scmp.eq.s32.totalorder %s35, 0
      %p319 = por %p317, %p318
      %s321 = sadd.s32 %s320, 1
      %p324 = scmp.eq.s32.totalorder %s29, 1
      %p325 = scmp.ne.s32.totalorder %s320, %s322
      %p326 = scmp.eq.s32.totalorder %s29, 0
      %p327 = por %p325, %p326
      %p328 = scmp.ne.s32.totalorder %s320, %s322
      %p329 = scmp.eq.s32.totalorder %s34, 1
      %p330 = por %p328, %p329
      %p331 = scmp.ne.s32.totalorder %s322, %s323
      %p332 = scmp.eq.s32.totalorder %s34, 0
      %p333 = por %p331, %p332
      %p334 = scmp.ne.s32.totalorder %s322, %s323
      %p335 = scmp.eq.s32.totalorder %s35, 1
      %p336 = por %p334, %p335
      %p338 = scmp.ne.s32.totalorder %s323, %s337
      %p339 = scmp.eq.s32.totalorder %s35, 0
      %p340 = por %p338, %p339
      %s341 = ssub.s32 %s29, %s36
      %p342 = scmp.eq.s32.totalorder %s341, 0
      %s344 = sadd.s32 %s343, 1
      %s345 = scalar_select %p342, %s343, %s344
      %p348 = pneg %p342
      %p349 = scmp.eq.s32.totalorder %s29, 1
      %p350 = por %p348, %p349
      %p351 = scmp.ne.s32.totalorder %s343, %s346
      %p352 = scmp.eq.s32.totalorder %s29, 0
      %p353 = por %p351, %p352
      %p354 = scmp.ne.s32.totalorder %s343, %s346
      %p355 = scmp.eq.s32.totalorder %s34, 1
      %p356 = por %p354, %p355
      %p357 = scmp.ne.s32.totalorder %s346, %s347
      %p358 = scmp.eq.s32.totalorder %s34, 0
      %p359 = por %p357, %p358
      %p360 = scmp.ne.s32.totalorder %s346, %s347
      %p361 = scmp.eq.s32.totalorder %s35, 1
      %p362 = por %p360, %p361
      %p364 = scmp.ne.s32.totalorder %s347, %s363
      %p365 = scmp.eq.s32.totalorder %s35, 0
      %p366 = por %p364, %p365
      %p367 = scmp.le.s32.totalorder 1, %s29
      %p368 = scmp.lt.s32.totalorder %s29, 3
      %p369 = pnand %p367, %p368
      %p370 = pneg %p369
      // Predicated region
      $region9: #{tpu_custom_call.1} parent=5 // pred_check
        _
      $region10: #{tpu_custom_call.1} parent=5 // pred_check_branch
        %372 = sbr.rel (%p369) target = $region12
      $region11: #{tpu_custom_call.1} parent=5 // pred_region
        %s373 = ssub.s32 %s29, 1
        // Predicated region
        $region13: #{tpu_custom_call.1} parent=11 // pred_check
          %p374 = pneg %p102
        $region14: #{tpu_custom_call.1} parent=11 // pred_check_branch
          %376 = sbr.rel (%p374) target = $region16
        $region15: #{tpu_custom_call.1} parent=11 // pred_region
          _
        $region16: #{tpu_custom_call.1} parent=11 // pred_fallthru
          _
        // Predicated region
        $region17: #{tpu_custom_call.1} parent=11 // pred_check
          %p377 = pneg %p123
        $region18: #{tpu_custom_call.1} parent=11 // pred_check_branch
          %379 = sbr.rel (%p377) target = $region20
        $region19: #{tpu_custom_call.1} parent=11 // pred_region
          _
        $region20: #{tpu_custom_call.1} parent=11 // pred_fallthru
          _
        // Predicated region
        $region21: #{tpu_custom_call.1} parent=11 // pred_check
          %p380 = pneg %p144
        $region22: #{tpu_custom_call.1} parent=11 // pred_check_branch
          %382 = sbr.rel (%p380) target = $region24
        $region23: #{tpu_custom_call.1} parent=11 // pred_region
          _
        $region24: #{tpu_custom_call.1} parent=11 // pred_fallthru
          _
        // Predicated region
        $region25: #{tpu_custom_call.1} parent=11 // pred_check
          %p383 = pneg %p165
        $region26: #{tpu_custom_call.1} parent=11 // pred_check_branch
          %385 = sbr.rel (%p383) target = $region28
        $region27: #{tpu_custom_call.1} parent=11 // pred_region
          _
        $region28: #{tpu_custom_call.1} parent=11 // pred_fallthru
          _
        // Predicated region
        $region29: #{tpu_custom_call.1} parent=11 // pred_check
          %p386 = pneg %p186
        $region30: #{tpu_custom_call.1} parent=11 // pred_check_branch
          %388 = sbr.rel (%p386) target = $region32
        $region31: #{tpu_custom_call.1} parent=11 // pred_region
          _
        $region32: #{tpu_custom_call.1} parent=11 // pred_fallthru
          _
        // Predicated region
        $region33: #{tpu_custom_call.1} parent=11 // pred_check
          %p389 = pneg %p207
        $region34: #{tpu_custom_call.1} parent=11 // pred_check_branch
          %391 = sbr.rel (%p389) target = $region36
        $region35: #{tpu_custom_call.1} parent=11 // pred_region
          _
        $region36: #{tpu_custom_call.1} parent=11 // pred_fallthru
          _
        // Predicated region
        $region37: #{tpu_custom_call.1} parent=11 // pred_check
          %p392 = pneg %p228
        $region38: #{tpu_custom_call.1} parent=11 // pred_check_branch
          %394 = sbr.rel (%p392) target = $region40
        $region39: #{tpu_custom_call.1} parent=11 // pred_region
          _
        $region40: #{tpu_custom_call.1} parent=11 // pred_fallthru
          _
        // Predicated region
        $region41: #{tpu_custom_call.1} parent=11 // pred_check
          %p395 = pneg %p249
        $region42: #{tpu_custom_call.1} parent=11 // pred_check_branch
          %397 = sbr.rel (%p395) target = $region44
        $region43: #{tpu_custom_call.1} parent=11 // pred_region
          _
        $region44: #{tpu_custom_call.1} parent=11 // pred_fallthru
          _
        // Predicated region
        $region45: #{tpu_custom_call.1} parent=11 // pred_check
          %p398 = pneg %p270
        $region46: #{tpu_custom_call.1} parent=11 // pred_check_branch
          %400 = sbr.rel (%p398) target = $region48
        $region47: #{tpu_custom_call.1} parent=11 // pred_region
          _
        $region48: #{tpu_custom_call.1} parent=11 // pred_fallthru
          _
        // Predicated region
        $region49: #{tpu_custom_call.1} parent=11 // pred_check
          %p401 = pneg %p291
        $region50: #{tpu_custom_call.1} parent=11 // pred_check_branch
          %403 = sbr.rel (%p401) target = $region52
        $region51: #{tpu_custom_call.1} parent=11 // pred_region
          _
        $region52: #{tpu_custom_call.1} parent=11 // pred_fallthru
          _
        // Predicated region
        $region53: #{tpu_custom_call.1} parent=11 // pred_check
          %p404 = pneg %p312
        $region54: #{tpu_custom_call.1} parent=11 // pred_check_branch
          %406 = sbr.rel (%p404) target = $region56
        $region55: #{tpu_custom_call.1} parent=11 // pred_region
          _
        $region56: #{tpu_custom_call.1} parent=11 // pred_fallthru
          _
        // Predicated region
        $region57: #{tpu_custom_call.1} parent=11 // pred_check
          %p407 = pneg %p333
        $region58: #{tpu_custom_call.1} parent=11 // pred_check_branch
          %409 = sbr.rel (%p407) target = $region60
        $region59: #{tpu_custom_call.1} parent=11 // pred_region
          _
        $region60: #{tpu_custom_call.1} parent=11 // pred_fallthru
          _
      $region12: #{tpu_custom_call.1} parent=5 // pred_fallthru
        _
      %p410 = scmp.lt.s32.totalorder %s29, 2
      // Predicated region
      $region61: #{tpu_custom_call.1} parent=5 // pred_check
        %p411 = pneg %p410
      $region62: #{tpu_custom_call.1} parent=5 // pred_check_branch
        %413 = sbr.rel (%p411) target = $region64
      $region63: #{tpu_custom_call.1} parent=5 // pred_region
        // Predicated region
        $region65: #{tpu_custom_call.1} parent=63 // pred_check
          %p414 = pneg %p49
        $region66: #{tpu_custom_call.1} parent=63 // pred_check_branch
          %416 = sbr.rel (%p414) target = $region68
        $region67: #{tpu_custom_call.1} parent=63 // pred_region
          %s417 = sand.u32 %s39, 1
          %s418 = scalar_lea.sflag [#allocation4], %s417
          %s419 = sand.u32 %s39, 1
          %s420 = smul.addr %s419, 8
          %s421 = scalar_lea.vmem [#allocation3], %s420
          %s423 = ssub.s32 128, 128
          %424 = vsyncadd %s418, %s423
          %s425 = smul.addr %s29, 128
          %s426 = scalar_lea.hbm %s0, %s425
          %s428 = sshll.u32 %s421, 4
          %s429 = int_to_ptr.vmem [resolvable:$true] %s428
          %431 = dma.hbm_to_vmem [thread:$0]  %s426, 128, %s429, %s418
        $region68: #{tpu_custom_call.1} parent=63 // pred_fallthru
          _
        // Predicated region
        $region69: #{tpu_custom_call.1} parent=63 // pred_check
          %p432 = pneg %p75
        $region70: #{tpu_custom_call.1} parent=63 // pred_check_branch
          %434 = sbr.rel (%p432) target = $region72
        $region71: #{tpu_custom_call.1} parent=63 // pred_region
          %s435 = sand.u32 %s65, 1
          %s436 = scalar_lea.sflag [#allocation7], %s435
          %s437 = sand.u32 %s65, 1
          %s438 = scalar_lea.vmem [#allocation6], %s437
          %s440 = ssub.s32 16, 16
          %441 = vsyncadd %s436, %s440
          %s442 = smul.addr %s29, 16
          %s443 = scalar_lea.hbm %s1, %s442
          %s445 = sshll.u32 %s438, 4
          %s446 = int_to_ptr.vmem [resolvable:$true] %s445
          %448 = dma.hbm_to_vmem [thread:$0]  %s443, 16, %s446, %s436
        $region72: #{tpu_custom_call.1} parent=63 // pred_fallthru
          _
      $region64: #{tpu_custom_call.1} parent=5 // pred_fallthru
        _
      %p449 = scmp.le.s32.totalorder 1, %s29
      %p450 = scmp.lt.s32.totalorder %s29, 3
      %p451 = pnand %p449, %p450
      %p452 = pneg %p451
      // Predicated region
      $region73: #{tpu_custom_call.1} parent=5 // pred_check
        _
      $region74: #{tpu_custom_call.1} parent=5 // pred_check_branch
        %454 = sbr.rel (%p451) target = $region76
      $region75: #{tpu_custom_call.1} parent=5 // pred_region
        %s455 = ssub.s32 %s29, 1
        %s456 = sand.u32 %s42, 1
        %s457 = scalar_lea.sflag [#allocation4], %s456
        %s458 = sand.u32 %s42, 1
        %s459 = smul.addr %s458, 8
        %s460 = scalar_lea.vmem [#allocation3], %s459
        // Predicated region
        $region77: #{tpu_custom_call.1} parent=75 // pred_check
          %p461 = pneg %p55
        $region78: #{tpu_custom_call.1} parent=75 // pred_check_branch
          %463 = sbr.rel (%p461) target = $region80
        $region79: #{tpu_custom_call.1} parent=75 // pred_region
          %464 = dma.done %s457, 128
        $region80: #{tpu_custom_call.1} parent=75 // pred_fallthru
          _
        %s465 = sand.u32 %s68, 1
        %s466 = scalar_lea.sflag [#allocation7], %s465
        %s467 = sand.u32 %s68, 1
        %s468 = scalar_lea.vmem [#allocation6], %s467
        // Predicated region
        $region81: #{tpu_custom_call.1} parent=75 // pred_check
          %p469 = pneg %p81
        $region82: #{tpu_custom_call.1} parent=75 // pred_check_branch
          %471 = sbr.rel (%p469) target = $region84
        $region83: #{tpu_custom_call.1} parent=75 // pred_region
          %472 = dma.done %s466, 16
        $region84: #{tpu_custom_call.1} parent=75 // pred_fallthru
          _
        %s473 = sand.u32 %s42, 1
        %s474 = scalar_lea.sflag [#allocation4], %s473
        %s475 = sand.u32 %s42, 1
        %s476 = smul.addr %s475, 8
        %s477 = scalar_lea.vmem [#allocation3], %s476
        %p478 = pneg %p55
        %p479 = pneg %p52
        %s480 = sand.u32 %s68, 1
        %s481 = scalar_lea.sflag [#allocation7], %s480
        %s482 = sand.u32 %s68, 1
        %s483 = scalar_lea.vmem [#allocation6], %s482
        %p484 = pneg %p81
        %p485 = pneg %p78
        %p486 = pneg %p102
        %p487 = pneg %p99
        %p488 = pneg %p123
        %p489 = pneg %p120
        %p490 = pneg %p144
        %p491 = pneg %p141
        %p492 = pneg %p165
        %p493 = pneg %p162
        %p494 = pneg %p186
        %p495 = pneg %p183
        %p496 = pneg %p207
        %p497 = pneg %p204
        %p498 = pneg %p228
        %p499 = pneg %p225
        %p500 = pneg %p249
        %p501 = pneg %p246
        %p502 = pneg %p270
        %p503 = pneg %p267
        %p504 = pneg %p291
        %p505 = pneg %p288
        %p506 = pneg %p312
        %p507 = pneg %p309
        %p508 = pneg %p333
        %p509 = pneg %p330
        %p510 = pneg %p359
        %p511 = pneg %p356
        %s512 = sand.u32 %s346, 1
        %s513 = scalar_lea.sflag [#allocation5], %s512
        %s514 = sand.u32 %s346, 1
        %s515 = smul.addr %s514, 8
        %s516 = scalar_lea.vmem [#allocation8], %s515
        %v517 = vld [vmem:[%s460] sm:$0xff]
        %v518 = vld [vmem:[%s468] sm:$0x1]
        %v519 = vld [vmem:[%s6] sm:$0x1]
        %v520 = vld [vmem:[%s7] sm:$0x1]
        %vm521 = vcmask 261120
        %v522 = vsel %vm521, %v517, 0.0
        %523 = vadd.xlane.f32.xlu0 %v522
        %v524 = vpop.xlane.xlu0 %523
        %v525 = vmul.f32 %v517, %v517
        %v526 = vsel %vm521, %v525, 0.0
        %527 = vadd.xlane.f32.xlu0 %v526
        %v528 = vpop.xlane.xlu0 %527
        %v529 = vmul.f32 %v524, 0.03125
        %v530 = vmul.f32 %v524, %v529
        %v531 = vsub.f32 %v528, %v530
        %v532 = vmax.f32 %v531, 0.0
        %v533 = vmul.f32 %v532, 0.032258064
        %v534 = vrsqrt.pop %v533
        %v535 = vmul.f32 %v533, %v534
        %vm536 = vcmp.eq.f32.partialorder %v533, inf
        %v537 = vsel %vm536, %v533, %v535
        %vm538 = vcmp.eq.f32.partialorder %v533, 0.0
        %v539 = vand.u32 %v533, 2147483648
        %v540 = vsel %vm538, %v539, %v537
        %v541 = vadd.f32 %v540, 1e-06
        %v542 = vrcp.pop %v541
        %v543 = vsub.f32 %v517, %v529
        %v544 = vmul.f32 %v543, %v542
        %v546 = vlaneseq
        %v547 = vshrl.u32 %v546, 7
        %v548 = vsub.s32 0, %v547
        %v549 = vrot.slane %v519, %v548
        %v551 = vmul.f32 %v549, %v544
        %v553 = vlaneseq
        %v554 = vshrl.u32 %v553, 7
        %v555 = vsub.s32 0, %v554
        %v556 = vrot.slane %v520, %v555
        %v558 = vadd.f32 %v551, %v556
        %v559 = vld [vmem:[%s2] sm:$0xff]
        %v560 = vld [vmem:[%s2 + $0x8] sm:$0xff]
        %v561 = vld [vmem:[%s2 + $0x10] sm:$0xff]
        %v562 = vld [vmem:[%s2 + $0x18] sm:$0xff]
        %v563 = vld [vmem:[%s3] sm:$0x1]
        %v565 = vlaneseq
        %v566 = vshrl.u32 %v565, 7
        %v567 = vsub.s32 0, %v566
        %v568 = vrot.slane %v563, %v567
        %v571 = vsel %vm521, %v558, 0
        %573 = vmatprep.subr.mxu0 0.0
        %574 = vmatpush1.msra.mxu0 0.0
        %575 = vmatprep.subr.mxu0 0.0
        %576 = vmatpush1.msra.mxu0 0.0
        %577 = vmatprep.subr.mxu0 0.0
        %578 = vmatpush1.msra.mxu0 0.0
        %579 = vmatprep.subr.mxu0 0.0
        %580 = vmatpush1.msra.mxu0 0.0
        %581 = vmatprep.subr.mxu0 0.0
        %582 = vmatpush1.msra.mxu0 0.0
        %583 = vmatprep.subr.mxu0 0.0
        %584 = vmatpush1.msra.mxu0 0.0
        %585 = vmatprep.subr.mxu0 0.0
        %586 = vmatpush1.msra.mxu0 0.0
        %587 = vmatprep.subr.mxu0 0.0
        %588 = vmatpush1.msra.mxu0 0.0
        %589 = vmatprep.subr.mxu0 0.0
        %590 = vmatpush1.msra.mxu0 0.0
        %591 = vmatprep.subr.mxu0 0.0
        %592 = vmatpush1.msra.mxu0 0.0
        %593 = vmatprep.subr.mxu0 0.0
        %594 = vmatpush1.msra.mxu0 0.0
        %595 = vmatprep.subr.mxu0 0.0
        %596 = vmatpush1.msra.mxu0 0.0
        %597 = vmatprep.subr.mxu0 0.0
        %598 = vmatpush1.msra.mxu0 %v562
        %599 = vmatprep.subr.mxu0 0.0
        %600 = vmatpush1.msra.mxu0 %v561
        %601 = vmatprep.subr.mxu0 0.0
        %602 = vmatpush1.msra.mxu0 %v560
        %603 = vmatprep.subr.mxu0 0.0
        %604 = vmatpush1.msra.mxu0 %v559
        %605 = vmatprep.subr.mxu0 0.0
        %606 = vmatpush2.msra.mxu0 0.0
        %607 = vmatprep.subr.mxu0 0.0
        %608 = vmatpush2.msra.mxu0 0.0
        %609 = vmatprep.subr.mxu0 0.0
        %610 = vmatpush2.msra.mxu0 0.0
        %611 = vmatprep.subr.mxu0 0.0
        %612 = vmatpush2.msra.mxu0 0.0
        %613 = vmatprep.subr.mxu0 0.0
        %614 = vmatpush2.msra.mxu0 0.0
        %615 = vmatprep.subr.mxu0 0.0
        %616 = vmatpush2.msra.mxu0 0.0
        %617 = vmatprep.subr.mxu0 0.0
        %618 = vmatpush2.msra.mxu0 0.0
        %619 = vmatprep.subr.mxu0 0.0
        %620 = vmatpush2.msra.mxu0 0.0
        %621 = vmatprep.subr.mxu0 0.0
        %622 = vmatpush2.msra.mxu0 0.0
        %623 = vmatprep.subr.mxu0 0.0
        %624 = vmatpush2.msra.mxu0 0.0
        %625 = vmatprep.subr.mxu0 0.0
        %626 = vmatpush2.msra.mxu0 0.0
        %627 = vmatprep.subr.mxu0 0.0
        %628 = vmatpush2.msra.mxu0 0.0
        %629 = vmatprep.subr.mxu0 0.0
        %630 = vmatpush2.msra.mxu0 0.0
        %631 = vmatprep.subr.mxu0 0.0
        %632 = vmatpush2.msra.mxu0 0.0
        %633 = vmatprep.subr.mxu0 0.0
        %634 = vmatpush2.msra.mxu0 0.0
        %635 = vmatprep.subr.mxu0 0.0
        %636 = vmatpush2.msra.mxu0 0.0
        %637 = vmatprep.mubr.f32.mxu0 0.0
        %638 = vmatmul.mubr.f32.gmra.mxu0 %v571
        %v639 = vpop.f32.mrf.mxu0
        %v640 = vadd.f32 %v568, %v639
        %v641 = vpop.f32.mrf.mxu0
        %642 = vdwg.mxu0
        %v643 = vmul.f32 %v640, 0.35355338
        %v644 = vld [vmem:[%s4] sm:$0xff]
        %v645 = vld [vmem:[%s4 + $0x8] sm:$0xff]
        %v646 = vld [vmem:[%s4 + $0x10] sm:$0xff]
        %v647 = vld [vmem:[%s4 + $0x18] sm:$0xff]
        %648 = vst.msk [vmem:[#allocation2] sm:$0xff] %vm521, 0.0
        %v650 = vlaneseq
        %v651 = vshrl.u32 %v650, 7
        %v652 = vsub.s32 0, %v651
        %v653 = vrot.slane %v518, %v652
        %656 = vrot.lane.b32.xlu0 %v640, 96
        %v657 = vpop.permute.xlu0 %656
        %vm658 = vcmask 64512
        %v660 = vsel %vm658, %v643, 0
        %v662 = vsel %vm658, %v657, 0
        %664 = vmatprep.subr.mxu0 0.0
        %665 = vmatpush1.xpose.msra.mxu0 0.0
        %666 = vmatprep.subr.mxu0 0.0
        %667 = vmatpush1.xpose.msra.mxu0 0.0
        %668 = vmatprep.subr.mxu0 0.0
        %669 = vmatpush1.xpose.msra.mxu0 0.0
        %670 = vmatprep.subr.mxu0 0.0
        %671 = vmatpush1.xpose.msra.mxu0 0.0
        %672 = vmatprep.subr.mxu0 0.0
        %673 = vmatpush1.xpose.msra.mxu0 0.0
        %674 = vmatprep.subr.mxu0 0.0
        %675 = vmatpush1.xpose.msra.mxu0 0.0
        %676 = vmatprep.subr.mxu0 0.0
        %677 = vmatpush1.xpose.msra.mxu0 0.0
        %678 = vmatprep.subr.mxu0 0.0
        %679 = vmatpush1.xpose.msra.mxu0 0.0
        %680 = vmatprep.subr.mxu0 0.0
        %681 = vmatpush1.xpose.msra.mxu0 0.0
        %682 = vmatprep.subr.mxu0 0.0
        %683 = vmatpush1.xpose.msra.mxu0 0.0
        %684 = vmatprep.subr.mxu0 0.0
        %685 = vmatpush1.xpose.msra.mxu0 0.0
        %686 = vmatprep.subr.mxu0 0.0
        %687 = vmatpush1.xpose.msra.mxu0 0.0
        %688 = vmatprep.subr.mxu0 0.0
        %689 = vmatpush1.xpose.msra.mxu0 0.0
        %690 = vmatprep.subr.mxu0 0.0
        %691 = vmatpush1.xpose.msra.mxu0 0.0
        %692 = vmatprep.subr.mxu0 0.0
        %693 = vmatpush1.xpose.msra.mxu0 0.0
        %694 = vmatprep.subr.mxu0 0.0
        %695 = vmatpush1.xpose.msra.mxu0 %v662
        %696 = vmatprep.subr.mxu0 0.0
        %697 = vmatpush2.xpose.msra.mxu0 0.0
        %698 = vmatprep.subr.mxu0 0.0
        %699 = vmatpush2.xpose.msra.mxu0 0.0
        %700 = vmatprep.subr.mxu0 0.0
        %701 = vmatpush2.xpose.msra.mxu0 0.0
        %702 = vmatprep.subr.mxu0 0.0
        %703 = vmatpush2.xpose.msra.mxu0 0.0
        %704 = vmatprep.subr.mxu0 0.0
        %705 = vmatpush2.xpose.msra.mxu0 0.0
        %706 = vmatprep.subr.mxu0 0.0
        %707 = vmatpush2.xpose.msra.mxu0 0.0
        %708 = vmatprep.subr.mxu0 0.0
        %709 = vmatpush2.xpose.msra.mxu0 0.0
        %710 = vmatprep.subr.mxu0 0.0
        %711 = vmatpush2.xpose.msra.mxu0 0.0
        %712 = vmatprep.subr.mxu0 0.0
        %713 = vmatpush2.xpose.msra.mxu0 0.0
        %714 = vmatprep.subr.mxu0 0.0
        %715 = vmatpush2.xpose.msra.mxu0 0.0
        %716 = vmatprep.subr.mxu0 0.0
        %717 = vmatpush2.xpose.msra.mxu0 0.0
        %718 = vmatprep.subr.mxu0 0.0
        %719 = vmatpush2.xpose.msra.mxu0 0.0
        %720 = vmatprep.subr.mxu0 0.0
        %721 = vmatpush2.xpose.msra.mxu0 0.0
        %722 = vmatprep.subr.mxu0 0.0
        %723 = vmatpush2.xpose.msra.mxu0 0.0
        %724 = vmatprep.subr.mxu0 0.0
        %725 = vmatpush2.xpose.msra.mxu0 0.0
        %726 = vmatprep.subr.mxu0 0.0
        %727 = vmatpush2.xpose.msra.mxu0 0.0
        %728 = vmatprep.mubr.f32.mxu0 0.0
        %729 = vmatmul.mubr.f32.gmra.mxu0 %v660
        %v730 = vpop.f32.mrf.mxu0
        %v731 = vadd.f32 %v653, %v730
        %v732 = vpop.f32.mrf.mxu0
        %733 = vdwg.mxu0
        %v734 = vsel %vm658, %v731, -inf
        %735 = vmax.xlane.f32.xlu0 %v734
        %v736 = vpop.xlane.xlu0 %735
        %v737 = vsub.f32 %v731, %v736
        %v738 = vmul.f32 %v737, 1.442695
        %v739 = vpow.pop %v738
        %v740 = vsel %vm658, %v739, 0.0
        %741 = vadd.xlane.f32.xlu0 %v740
        %v742 = vpop.xlane.xlu0 %741
        %v743 = vrcp.pop %v742
        %744 = vrot.lane.b32.xlu0 %v640, 64
        %v745 = vpop.permute.xlu0 %744
        %v748 = vsel %vm658, %v739, 0
        %750 = vmatprep.subr.mxu0 0.0
        %751 = vmatpush1.msra.mxu0 0.0
        %752 = vmatprep.subr.mxu0 0.0
        %753 = vmatpush1.msra.mxu0 0.0
        %754 = vmatprep.subr.mxu0 0.0
        %755 = vmatpush1.msra.mxu0 0.0
        %756 = vmatprep.subr.mxu0 0.0
        %757 = vmatpush1.msra.mxu0 0.0
        %758 = vmatprep.subr.mxu0 0.0
        %759 = vmatpush1.msra.mxu0 0.0
        %760 = vmatprep.subr.mxu0 0.0
        %761 = vmatpush1.msra.mxu0 0.0
        %762 = vmatprep.subr.mxu0 0.0
        %763 = vmatpush1.msra.mxu0 0.0
        %764 = vmatprep.subr.mxu0 0.0
        %765 = vmatpush1.msra.mxu0 0.0
        %766 = vmatprep.subr.mxu0 0.0
        %767 = vmatpush1.msra.mxu0 0.0
        %768 = vmatprep.subr.mxu0 0.0
        %769 = vmatpush1.msra.mxu0 0.0
        %770 = vmatprep.subr.mxu0 0.0
        %771 = vmatpush1.msra.mxu0 0.0
        %772 = vmatprep.subr.mxu0 0.0
        %773 = vmatpush1.msra.mxu0 0.0
        %774 = vmatprep.subr.mxu0 0.0
        %775 = vmatpush1.msra.mxu0 0.0
        %776 = vmatprep.subr.mxu0 0.0
        %777 = vmatpush1.msra.mxu0 0.0
        %778 = vmatprep.subr.mxu0 0.0
        %779 = vmatpush1.msra.mxu0 0.0
        %780 = vmatprep.subr.mxu0 0.0
        %781 = vmatpush1.msra.mxu0 %v745
        %782 = vmatprep.subr.mxu0 0.0
        %783 = vmatpush2.msra.mxu0 0.0
        %784 = vmatprep.subr.mxu0 0.0
        %785 = vmatpush2.msra.mxu0 0.0
        %786 = vmatprep.subr.mxu0 0.0
        %787 = vmatpush2.msra.mxu0 0.0
        %788 = vmatprep.subr.mxu0 0.0
        %789 = vmatpush2.msra.mxu0 0.0
        %790 = vmatprep.subr.mxu0 0.0
        %791 = vmatpush2.msra.mxu0 0.0
        %792 = vmatprep.subr.mxu0 0.0
        %793 = vmatpush2.msra.mxu0 0.0
        %794 = vmatprep.subr.mxu0 0.0
        %795 = vmatpush2.msra.mxu0 0.0
        %796 = vmatprep.subr.mxu0 0.0
        %797 = vmatpush2.msra.mxu0 0.0
        %798 = vmatprep.subr.mxu0 0.0
        %799 = vmatpush2.msra.mxu0 0.0
        %800 = vmatprep.subr.mxu0 0.0
        %801 = vmatpush2.msra.mxu0 0.0
        %802 = vmatprep.subr.mxu0 0.0
        %803 = vmatpush2.msra.mxu0 0.0
        %804 = vmatprep.subr.mxu0 0.0
        %805 = vmatpush2.msra.mxu0 0.0
        %806 = vmatprep.subr.mxu0 0.0
        %807 = vmatpush2.msra.mxu0 0.0
        %808 = vmatprep.subr.mxu0 0.0
        %809 = vmatpush2.msra.mxu0 0.0
        %810 = vmatprep.subr.mxu0 0.0
        %811 = vmatpush2.msra.mxu0 0.0
        %812 = vmatprep.subr.mxu0 0.0
        %813 = vmatpush2.msra.mxu0 0.0
        %814 = vmatprep.mubr.f32.mxu0 0.0
        %815 = vmatmul.mubr.f32.gmra.mxu0 %v748
        %v816 = vpop.f32.mrf.mxu0
        %v817 = vadd.f32 0.0, %v816
        %v818 = vpop.f32.mrf.mxu0
        %819 = vdwg.mxu0
        %v820 = vmul.f32 %v817, %v743
        %v821 = vld [vmem:[#allocation2] sm:$0xff]
        %v823 = vsel %vm658, %v820, 0
        %825 = vmatprep.subr.mxu0 0.0
        %826 = vmatpush1.msra.mxu0 0.0
        %827 = vmatprep.subr.mxu0 0.0
        %828 = vmatpush1.msra.mxu0 0.0
        %829 = vmatprep.subr.mxu0 0.0
        %830 = vmatpush1.msra.mxu0 0.0
        %831 = vmatprep.subr.mxu0 0.0
        %832 = vmatpush1.msra.mxu0 0.0
        %833 = vmatprep.subr.mxu0 0.0
        %834 = vmatpush1.msra.mxu0 0.0
        %835 = vmatprep.subr.mxu0 0.0
        %836 = vmatpush1.msra.mxu0 0.0
        %837 = vmatprep.subr.mxu0 0.0
        %838 = vmatpush1.msra.mxu0 0.0
        %839 = vmatprep.subr.mxu0 0.0
        %840 = vmatpush1.msra.mxu0 0.0
        %841 = vmatprep.subr.mxu0 0.0
        %842 = vmatpush1.msra.mxu0 0.0
        %843 = vmatprep.subr.mxu0 0.0
        %844 = vmatpush1.msra.mxu0 0.0
        %845 = vmatprep.subr.mxu0 0.0
        %846 = vmatpush1.msra.mxu0 0.0
        %847 = vmatprep.subr.mxu0 0.0
        %848 = vmatpush1.msra.mxu0 0.0
        %849 = vmatprep.subr.mxu0 0.0
        %850 = vmatpush1.msra.mxu0 0.0
        %851 = vmatprep.subr.mxu0 0.0
        %852 = vmatpush1.msra.mxu0 0.0
        %853 = vmatprep.subr.mxu0 0.0
        %854 = vmatpush1.msra.mxu0 0.0
        %855 = vmatprep.subr.mxu0 0.0
        %856 = vmatpush1.msra.mxu0 %v644
        %857 = vmatprep.subr.mxu0 0.0
        %858 = vmatpush2.msra.mxu0 0.0
        %859 = vmatprep.subr.mxu0 0.0
        %860 = vmatpush2.msra.mxu0 0.0
        %861 = vmatprep.subr.mxu0 0.0
        %862 = vmatpush2.msra.mxu0 0.0
        %863 = vmatprep.subr.mxu0 0.0
        %864 = vmatpush2.msra.mxu0 0.0
        %865 = vmatprep.subr.mxu0 0.0
        %866 = vmatpush2.msra.mxu0 0.0
        %867 = vmatprep.subr.mxu0 0.0
        %868 = vmatpush2.msra.mxu0 0.0
        %869 = vmatprep.subr.mxu0 0.0
        %870 = vmatpush2.msra.mxu0 0.0
        %871 = vmatprep.subr.mxu0 0.0
        %872 = vmatpush2.msra.mxu0 0.0
        %873 = vmatprep.subr.mxu0 0.0
        %874 = vmatpush2.msra.mxu0 0.0
        %875 = vmatprep.subr.mxu0 0.0
        %876 = vmatpush2.msra.mxu0 0.0
        %877 = vmatprep.subr.mxu0 0.0
        %878 = vmatpush2.msra.mxu0 0.0
        %879 = vmatprep.subr.mxu0 0.0
        %880 = vmatpush2.msra.mxu0 0.0
        %881 = vmatprep.subr.mxu0 0.0
        %882 = vmatpush2.msra.mxu0 0.0
        %883 = vmatprep.subr.mxu0 0.0
        %884 = vmatpush2.msra.mxu0 0.0
        %885 = vmatprep.subr.mxu0 0.0
        %886 = vmatpush2.msra.mxu0 0.0
        %887 = vmatprep.subr.mxu0 0.0
        %888 = vmatpush2.msra.mxu0 0.0
        %889 = vmatprep.mubr.f32.mxu0 0.0
        %890 = vmatmul.mubr.f32.gmra.mxu0 %v823
        %v891 = vpop.f32.mrf.mxu0
        %v892 = vadd.f32 0.0, %v891
        %v893 = vpop.f32.mrf.mxu0
        %894 = vdwg.mxu0
        %v895 = vadd.f32 %v821, %v892
        %896 = vst.msk [vmem:[#allocation2] sm:$0xff] %vm521, %v895
        %897 = vrot.lane.b32.xlu0 %v643, 120
        %v898 = vpop.permute.xlu0 %897
        %899 = vrot.lane.b32.xlu0 %v640, 88
        %v900 = vpop.permute.xlu0 %899
        %v901 = vsel %vm658, %v898, 0
        %v903 = vsel %vm658, %v900, 0
        %905 = vmatprep.subr.mxu0 0.0
        %906 = vmatpush1.xpose.msra.mxu0 0.0
        %907 = vmatprep.subr.mxu0 0.0
        %908 = vmatpush1.xpose.msra.mxu0 0.0
        %909 = vmatprep.subr.mxu0 0.0
        %910 = vmatpush1.xpose.msra.mxu0 0.0
        %911 = vmatprep.subr.mxu0 0.0
        %912 = vmatpush1.xpose.msra.mxu0 0.0
        %913 = vmatprep.subr.mxu0 0.0
        %914 = vmatpush1.xpose.msra.mxu0 0.0
        %915 = vmatprep.subr.mxu0 0.0
        %916 = vmatpush1.xpose.msra.mxu0 0.0
        %917 = vmatprep.subr.mxu0 0.0
        %918 = vmatpush1.xpose.msra.mxu0 0.0
        %919 = vmatprep.subr.mxu0 0.0
        %920 = vmatpush1.xpose.msra.mxu0 0.0
        %921 = vmatprep.subr.mxu0 0.0
        %922 = vmatpush1.xpose.msra.mxu0 0.0
        %923 = vmatprep.subr.mxu0 0.0
        %924 = vmatpush1.xpose.msra.mxu0 0.0
        %925 = vmatprep.subr.mxu0 0.0
        %926 = vmatpush1.xpose.msra.mxu0 0.0
        %927 = vmatprep.subr.mxu0 0.0
        %928 = vmatpush1.xpose.msra.mxu0 0.0
        %929 = vmatprep.subr.mxu0 0.0
        %930 = vmatpush1.xpose.msra.mxu0 0.0
        %931 = vmatprep.subr.mxu0 0.0
        %932 = vmatpush1.xpose.msra.mxu0 0.0
        %933 = vmatprep.subr.mxu0 0.0
        %934 = vmatpush1.xpose.msra.mxu0 0.0
        %935 = vmatprep.subr.mxu0 0.0
        %936 = vmatpush1.xpose.msra.mxu0 %v903
        %937 = vmatprep.subr.mxu0 0.0
        %938 = vmatpush2.xpose.msra.mxu0 0.0
        %939 = vmatprep.subr.mxu0 0.0
        %940 = vmatpush2.xpose.msra.mxu0 0.0
        %941 = vmatprep.subr.mxu0 0.0
        %942 = vmatpush2.xpose.msra.mxu0 0.0
        %943 = vmatprep.subr.mxu0 0.0
        %944 = vmatpush2.xpose.msra.mxu0 0.0
        %945 = vmatprep.subr.mxu0 0.0
        %946 = vmatpush2.xpose.msra.mxu0 0.0
        %947 = vmatprep.subr.mxu0 0.0
        %948 = vmatpush2.xpose.msra.mxu0 0.0
        %949 = vmatprep.subr.mxu0 0.0
        %950 = vmatpush2.xpose.msra.mxu0 0.0
        %951 = vmatprep.subr.mxu0 0.0
        %952 = vmatpush2.xpose.msra.mxu0 0.0
        %953 = vmatprep.subr.mxu0 0.0
        %954 = vmatpush2.xpose.msra.mxu0 0.0
        %955 = vmatprep.subr.mxu0 0.0
        %956 = vmatpush2.xpose.msra.mxu0 0.0
        %957 = vmatprep.subr.mxu0 0.0
        %958 = vmatpush2.xpose.msra.mxu0 0.0
        %959 = vmatprep.subr.mxu0 0.0
        %960 = vmatpush2.xpose.msra.mxu0 0.0
        %961 = vmatprep.subr.mxu0 0.0
        %962 = vmatpush2.xpose.msra.mxu0 0.0
        %963 = vmatprep.subr.mxu0 0.0
        %964 = vmatpush2.xpose.msra.mxu0 0.0
        %965 = vmatprep.subr.mxu0 0.0
        %966 = vmatpush2.xpose.msra.mxu0 0.0
        %967 = vmatprep.subr.mxu0 0.0
        %968 = vmatpush2.xpose.msra.mxu0 0.0
        %969 = vmatprep.mubr.f32.mxu0 0.0
        %970 = vmatmul.mubr.f32.gmra.mxu0 %v901
        %v971 = vpop.f32.mrf.mxu0
        %v972 = vadd.f32 %v653, %v971
        %v973 = vpop.f32.mrf.mxu0
        %974 = vdwg.mxu0
        %v975 = vsel %vm658, %v972, -inf
        %976 = vmax.xlane.f32.xlu0 %v975
        %v977 = vpop.xlane.xlu0 %976
        %v978 = vsub.f32 %v972, %v977
        %v979 = vmul.f32 %v978, 1.442695
        %v980 = vpow.pop %v979
        %v981 = vsel %vm658, %v980, 0.0
        %982 = vadd.xlane.f32.xlu0 %v981
        %v983 = vpop.xlane.xlu0 %982
        %v984 = vrcp.pop %v983
        %985 = vrot.lane.b32.xlu0 %v640, 56
        %v986 = vpop.permute.xlu0 %985
        %v989 = vsel %vm658, %v980, 0
        %991 = vmatprep.subr.mxu0 0.0
        %992 = vmatpush1.msra.mxu0 0.0
        %993 = vmatprep.subr.mxu0 0.0
        %994 = vmatpush1.msra.mxu0 0.0
        %995 = vmatprep.subr.mxu0 0.0
        %996 = vmatpush1.msra.mxu0 0.0
        %997 = vmatprep.subr.mxu0 0.0
        %998 = vmatpush1.msra.mxu0 0.0
        %999 = vmatprep.subr.mxu0 0.0
        %1000 = vmatpush1.msra.mxu0 0.0
        %1001 = vmatprep.subr.mxu0 0.0
        %1002 = vmatpush1.msra.mxu0 0.0
        %1003 = vmatprep.subr.mxu0 0.0
        %1004 = vmatpush1.msra.mxu0 0.0
        %1005 = vmatprep.subr.mxu0 0.0
        %1006 = vmatpush1.msra.mxu0 0.0
        %1007 = vmatprep.subr.mxu0 0.0
        %1008 = vmatpush1.msra.mxu0 0.0
        %1009 = vmatprep.subr.mxu0 0.0
        %1010 = vmatpush1.msra.mxu0 0.0
        %1011 = vmatprep.subr.mxu0 0.0
        %1012 = vmatpush1.msra.mxu0 0.0
        %1013 = vmatprep.subr.mxu0 0.0
        %1014 = vmatpush1.msra.mxu0 0.0
        %1015 = vmatprep.subr.mxu0 0.0
        %1016 = vmatpush1.msra.mxu0 0.0
        %1017 = vmatprep.subr.mxu0 0.0
        %1018 = vmatpush1.msra.mxu0 0.0
        %1019 = vmatprep.subr.mxu0 0.0
        %1020 = vmatpush1.msra.mxu0 0.0
        %1021 = vmatprep.subr.mxu0 0.0
        %1022 = vmatpush1.msra.mxu0 %v986
        %1023 = vmatprep.subr.mxu0 0.0
        %1024 = vmatpush2.msra.mxu0 0.0
        %1025 = vmatprep.subr.mxu0 0.0
        %1026 = vmatpush2.msra.mxu0 0.0
        %1027 = vmatprep.subr.mxu0 0.0
        %1028 = vmatpush2.msra.mxu0 0.0
        %1029 = vmatprep.subr.mxu0 0.0
        %1030 = vmatpush2.msra.mxu0 0.0
        %1031 = vmatprep.subr.mxu0 0.0
        %1032 = vmatpush2.msra.mxu0 0.0
        %1033 = vmatprep.subr.mxu0 0.0
        %1034 = vmatpush2.msra.mxu0 0.0
        %1035 = vmatprep.subr.mxu0 0.0
        %1036 = vmatpush2.msra.mxu0 0.0
        %1037 = vmatprep.subr.mxu0 0.0
        %1038 = vmatpush2.msra.mxu0 0.0
        %1039 = vmatprep.subr.mxu0 0.0
        %1040 = vmatpush2.msra.mxu0 0.0
        %1041 = vmatprep.subr.mxu0 0.0
        %1042 = vmatpush2.msra.mxu0 0.0
        %1043 = vmatprep.subr.mxu0 0.0
        %1044 = vmatpush2.msra.mxu0 0.0
        %1045 = vmatprep.subr.mxu0 0.0
        %1046 = vmatpush2.msra.mxu0 0.0
        %1047 = vmatprep.subr.mxu0 0.0
        %1048 = vmatpush2.msra.mxu0 0.0
        %1049 = vmatprep.subr.mxu0 0.0
        %1050 = vmatpush2.msra.mxu0 0.0
        %1051 = vmatprep.subr.mxu0 0.0
        %1052 = vmatpush2.msra.mxu0 0.0
        %1053 = vmatprep.subr.mxu0 0.0
        %1054 = vmatpush2.msra.mxu0 0.0
        %1055 = vmatprep.mubr.f32.mxu0 0.0
        %1056 = vmatmul.mubr.f32.gmra.mxu0 %v989
        %v1057 = vpop.f32.mrf.mxu0
        %v1058 = vadd.f32 0.0, %v1057
        %v1059 = vpop.f32.mrf.mxu0
        %1060 = vdwg.mxu0
        %v1061 = vmul.f32 %v1058, %v984
        %v1062 = vld [vmem:[#allocation2] sm:$0xff]
        %v1064 = vsel %vm658, %v1061, 0
        %1066 = vmatprep.subr.mxu0 0.0
        %1067 = vmatpush1.msra.mxu0 0.0
        %1068 = vmatprep.subr.mxu0 0.0
        %1069 = vmatpush1.msra.mxu0 0.0
        %1070 = vmatprep.subr.mxu0 0.0
        %1071 = vmatpush1.msra.mxu0 0.0
        %1072 = vmatprep.subr.mxu0 0.0
        %1073 = vmatpush1.msra.mxu0 0.0
        %1074 = vmatprep.subr.mxu0 0.0
        %1075 = vmatpush1.msra.mxu0 0.0
        %1076 = vmatprep.subr.mxu0 0.0
        %1077 = vmatpush1.msra.mxu0 0.0
        %1078 = vmatprep.subr.mxu0 0.0
        %1079 = vmatpush1.msra.mxu0 0.0
        %1080 = vmatprep.subr.mxu0 0.0
        %1081 = vmatpush1.msra.mxu0 0.0
        %1082 = vmatprep.subr.mxu0 0.0
        %1083 = vmatpush1.msra.mxu0 0.0
        %1084 = vmatprep.subr.mxu0 0.0
        %1085 = vmatpush1.msra.mxu0 0.0
        %1086 = vmatprep.subr.mxu0 0.0
        %1087 = vmatpush1.msra.mxu0 0.0
        %1088 = vmatprep.subr.mxu0 0.0
        %1089 = vmatpush1.msra.mxu0 0.0
        %1090 = vmatprep.subr.mxu0 0.0
        %1091 = vmatpush1.msra.mxu0 0.0
        %1092 = vmatprep.subr.mxu0 0.0
        %1093 = vmatpush1.msra.mxu0 0.0
        %1094 = vmatprep.subr.mxu0 0.0
        %1095 = vmatpush1.msra.mxu0 0.0
        %1096 = vmatprep.subr.mxu0 0.0
        %1097 = vmatpush1.msra.mxu0 %v645
        %1098 = vmatprep.subr.mxu0 0.0
        %1099 = vmatpush2.msra.mxu0 0.0
        %1100 = vmatprep.subr.mxu0 0.0
        %1101 = vmatpush2.msra.mxu0 0.0
        %1102 = vmatprep.subr.mxu0 0.0
        %1103 = vmatpush2.msra.mxu0 0.0
        %1104 = vmatprep.subr.mxu0 0.0
        %1105 = vmatpush2.msra.mxu0 0.0
        %1106 = vmatprep.subr.mxu0 0.0
        %1107 = vmatpush2.msra.mxu0 0.0
        %1108 = vmatprep.subr.mxu0 0.0
        %1109 = vmatpush2.msra.mxu0 0.0
        %1110 = vmatprep.subr.mxu0 0.0
        %1111 = vmatpush2.msra.mxu0 0.0
        %1112 = vmatprep.subr.mxu0 0.0
        %1113 = vmatpush2.msra.mxu0 0.0
        %1114 = vmatprep.subr.mxu0 0.0
        %1115 = vmatpush2.msra.mxu0 0.0
        %1116 = vmatprep.subr.mxu0 0.0
        %1117 = vmatpush2.msra.mxu0 0.0
        %1118 = vmatprep.subr.mxu0 0.0
        %1119 = vmatpush2.msra.mxu0 0.0
        %1120 = vmatprep.subr.mxu0 0.0
        %1121 = vmatpush2.msra.mxu0 0.0
        %1122 = vmatprep.subr.mxu0 0.0
        %1123 = vmatpush2.msra.mxu0 0.0
        %1124 = vmatprep.subr.mxu0 0.0
        %1125 = vmatpush2.msra.mxu0 0.0
        %1126 = vmatprep.subr.mxu0 0.0
        %1127 = vmatpush2.msra.mxu0 0.0
        %1128 = vmatprep.subr.mxu0 0.0
        %1129 = vmatpush2.msra.mxu0 0.0
        %1130 = vmatprep.mubr.f32.mxu0 0.0
        %1131 = vmatmul.mubr.f32.gmra.mxu0 %v1064
        %v1132 = vpop.f32.mrf.mxu0
        %v1133 = vadd.f32 0.0, %v1132
        %v1134 = vpop.f32.mrf.mxu0
        %1135 = vdwg.mxu0
        %v1136 = vadd.f32 %v1062, %v1133
        %1137 = vst.msk [vmem:[#allocation2] sm:$0xff] %vm521, %v1136
        %1138 = vrot.lane.b32.xlu0 %v643, 112
        %v1139 = vpop.permute.xlu0 %1138
        %1140 = vrot.lane.b32.xlu0 %v640, 80
        %v1141 = vpop.permute.xlu0 %1140
        %v1142 = vsel %vm658, %v1139, 0
        %v1144 = vsel %vm658, %v1141, 0
        %1146 = vmatprep.subr.mxu0 0.0
        %1147 = vmatpush1.xpose.msra.mxu0 0.0
        %1148 = vmatprep.subr.mxu0 0.0
        %1149 = vmatpush1.xpose.msra.mxu0 0.0
        %1150 = vmatprep.subr.mxu0 0.0
        %1151 = vmatpush1.xpose.msra.mxu0 0.0
        %1152 = vmatprep.subr.mxu0 0.0
        %1153 = vmatpush1.xpose.msra.mxu0 0.0
        %1154 = vmatprep.subr.mxu0 0.0
        %1155 = vmatpush1.xpose.msra.mxu0 0.0
        %1156 = vmatprep.subr.mxu0 0.0
        %1157 = vmatpush1.xpose.msra.mxu0 0.0
        %1158 = vmatprep.subr.mxu0 0.0
        %1159 = vmatpush1.xpose.msra.mxu0 0.0
        %1160 = vmatprep.subr.mxu0 0.0
        %1161 = vmatpush1.xpose.msra.mxu0 0.0
        %1162 = vmatprep.subr.mxu0 0.0
        %1163 = vmatpush1.xpose.msra.mxu0 0.0
        %1164 = vmatprep.subr.mxu0 0.0
        %1165 = vmatpush1.xpose.msra.mxu0 0.0
        %1166 = vmatprep.subr.mxu0 0.0
        %1167 = vmatpush1.xpose.msra.mxu0 0.0
        %1168 = vmatprep.subr.mxu0 0.0
        %1169 = vmatpush1.xpose.msra.mxu0 0.0
        %1170 = vmatprep.subr.mxu0 0.0
        %1171 = vmatpush1.xpose.msra.mxu0 0.0
        %1172 = vmatprep.subr.mxu0 0.0
        %1173 = vmatpush1.xpose.msra.mxu0 0.0
        %1174 = vmatprep.subr.mxu0 0.0
        %1175 = vmatpush1.xpose.msra.mxu0 0.0
        %1176 = vmatprep.subr.mxu0 0.0
        %1177 = vmatpush1.xpose.msra.mxu0 %v1144
        %1178 = vmatprep.subr.mxu0 0.0
        %1179 = vmatpush2.xpose.msra.mxu0 0.0
        %1180 = vmatprep.subr.mxu0 0.0
        %1181 = vmatpush2.xpose.msra.mxu0 0.0
        %1182 = vmatprep.subr.mxu0 0.0
        %1183 = vmatpush2.xpose.msra.mxu0 0.0
        %1184 = vmatprep.subr.mxu0 0.0
        %1185 = vmatpush2.xpose.msra.mxu0 0.0
        %1186 = vmatprep.subr.mxu0 0.0
        %1187 = vmatpush2.xpose.msra.mxu0 0.0
        %1188 = vmatprep.subr.mxu0 0.0
        %1189 = vmatpush2.xpose.msra.mxu0 0.0
        %1190 = vmatprep.subr.mxu0 0.0
        %1191 = vmatpush2.xpose.msra.mxu0 0.0
        %1192 = vmatprep.subr.mxu0 0.0
        %1193 = vmatpush2.xpose.msra.mxu0 0.0
        %1194 = vmatprep.subr.mxu0 0.0
        %1195 = vmatpush2.xpose.msra.mxu0 0.0
        %1196 = vmatprep.subr.mxu0 0.0
        %1197 = vmatpush2.xpose.msra.mxu0 0.0
        %1198 = vmatprep.subr.mxu0 0.0
        %1199 = vmatpush2.xpose.msra.mxu0 0.0
        %1200 = vmatprep.subr.mxu0 0.0
        %1201 = vmatpush2.xpose.msra.mxu0 0.0
        %1202 = vmatprep.subr.mxu0 0.0
        %1203 = vmatpush2.xpose.msra.mxu0 0.0
        %1204 = vmatprep.subr.mxu0 0.0
        %1205 = vmatpush2.xpose.msra.mxu0 0.0
        %1206 = vmatprep.subr.mxu0 0.0
        %1207 = vmatpush2.xpose.msra.mxu0 0.0
        %1208 = vmatprep.subr.mxu0 0.0
        %1209 = vmatpush2.xpose.msra.mxu0 0.0
        %1210 = vmatprep.mubr.f32.mxu0 0.0
        %1211 = vmatmul.mubr.f32.gmra.mxu0 %v1142
        %v1212 = vpop.f32.mrf.mxu0
        %v1213 = vadd.f32 %v653, %v1212
        %v1214 = vpop.f32.mrf.mxu0
        %1215 = vdwg.mxu0
        %v1216 = vsel %vm658, %v1213, -inf
        %1217 = vmax.xlane.f32.xlu0 %v1216
        %v1218 = vpop.xlane.xlu0 %1217
        %v1219 = vsub.f32 %v1213, %v1218
        %v1220 = vmul.f32 %v1219, 1.442695
        %v1221 = vpow.pop %v1220
        %v1222 = vsel %vm658, %v1221, 0.0
        %1223 = vadd.xlane.f32.xlu0 %v1222
        %v1224 = vpop.xlane.xlu0 %1223
        %v1225 = vrcp.pop %v1224
        %1226 = vrot.lane.b32.xlu0 %v640, 48
        %v1227 = vpop.permute.xlu0 %1226
        %v1230 = vsel %vm658, %v1221, 0
        %1232 = vmatprep.subr.mxu0 0.0
        %1233 = vmatpush1.msra.mxu0 0.0
        %1234 = vmatprep.subr.mxu0 0.0
        %1235 = vmatpush1.msra.mxu0 0.0
        %1236 = vmatprep.subr.mxu0 0.0
        %1237 = vmatpush1.msra.mxu0 0.0
        %1238 = vmatprep.subr.mxu0 0.0
        %1239 = vmatpush1.msra.mxu0 0.0
        %1240 = vmatprep.subr.mxu0 0.0
        %1241 = vmatpush1.msra.mxu0 0.0
        %1242 = vmatprep.subr.mxu0 0.0
        %1243 = vmatpush1.msra.mxu0 0.0
        %1244 = vmatprep.subr.mxu0 0.0
        %1245 = vmatpush1.msra.mxu0 0.0
        %1246 = vmatprep.subr.mxu0 0.0
        %1247 = vmatpush1.msra.mxu0 0.0
        %1248 = vmatprep.subr.mxu0 0.0
        %1249 = vmatpush1.msra.mxu0 0.0
        %1250 = vmatprep.subr.mxu0 0.0
        %1251 = vmatpush1.msra.mxu0 0.0
        %1252 = vmatprep.subr.mxu0 0.0
        %1253 = vmatpush1.msra.mxu0 0.0
        %1254 = vmatprep.subr.mxu0 0.0
        %1255 = vmatpush1.msra.mxu0 0.0
        %1256 = vmatprep.subr.mxu0 0.0
        %1257 = vmatpush1.msra.mxu0 0.0
        %1258 = vmatprep.subr.mxu0 0.0
        %1259 = vmatpush1.msra.mxu0 0.0
        %1260 = vmatprep.subr.mxu0 0.0
        %1261 = vmatpush1.msra.mxu0 0.0
        %1262 = vmatprep.subr.mxu0 0.0
        %1263 = vmatpush1.msra.mxu0 %v1227
        %1264 = vmatprep.subr.mxu0 0.0
        %1265 = vmatpush2.msra.mxu0 0.0
        %1266 = vmatprep.subr.mxu0 0.0
        %1267 = vmatpush2.msra.mxu0 0.0
        %1268 = vmatprep.subr.mxu0 0.0
        %1269 = vmatpush2.msra.mxu0 0.0
        %1270 = vmatprep.subr.mxu0 0.0
        %1271 = vmatpush2.msra.mxu0 0.0
        %1272 = vmatprep.subr.mxu0 0.0
        %1273 = vmatpush2.msra.mxu0 0.0
        %1274 = vmatprep.subr.mxu0 0.0
        %1275 = vmatpush2.msra.mxu0 0.0
        %1276 = vmatprep.subr.mxu0 0.0
        %1277 = vmatpush2.msra.mxu0 0.0
        %1278 = vmatprep.subr.mxu0 0.0
        %1279 = vmatpush2.msra.mxu0 0.0
        %1280 = vmatprep.subr.mxu0 0.0
        %1281 = vmatpush2.msra.mxu0 0.0
        %1282 = vmatprep.subr.mxu0 0.0
        %1283 = vmatpush2.msra.mxu0 0.0
        %1284 = vmatprep.subr.mxu0 0.0
        %1285 = vmatpush2.msra.mxu0 0.0
        %1286 = vmatprep.subr.mxu0 0.0
        %1287 = vmatpush2.msra.mxu0 0.0
        %1288 = vmatprep.subr.mxu0 0.0
        %1289 = vmatpush2.msra.mxu0 0.0
        %1290 = vmatprep.subr.mxu0 0.0
        %1291 = vmatpush2.msra.mxu0 0.0
        %1292 = vmatprep.subr.mxu0 0.0
        %1293 = vmatpush2.msra.mxu0 0.0
        %1294 = vmatprep.subr.mxu0 0.0
        %1295 = vmatpush2.msra.mxu0 0.0
        %1296 = vmatprep.mubr.f32.mxu0 0.0
        %1297 = vmatmul.mubr.f32.gmra.mxu0 %v1230
        %v1298 = vpop.f32.mrf.mxu0
        %v1299 = vadd.f32 0.0, %v1298
        %v1300 = vpop.f32.mrf.mxu0
        %1301 = vdwg.mxu0
        %v1302 = vmul.f32 %v1299, %v1225
        %v1303 = vld [vmem:[#allocation2] sm:$0xff]
        %v1305 = vsel %vm658, %v1302, 0
        %1307 = vmatprep.subr.mxu0 0.0
        %1308 = vmatpush1.msra.mxu0 0.0
        %1309 = vmatprep.subr.mxu0 0.0
        %1310 = vmatpush1.msra.mxu0 0.0
        %1311 = vmatprep.subr.mxu0 0.0
        %1312 = vmatpush1.msra.mxu0 0.0
        %1313 = vmatprep.subr.mxu0 0.0
        %1314 = vmatpush1.msra.mxu0 0.0
        %1315 = vmatprep.subr.mxu0 0.0
        %1316 = vmatpush1.msra.mxu0 0.0
        %1317 = vmatprep.subr.mxu0 0.0
        %1318 = vmatpush1.msra.mxu0 0.0
        %1319 = vmatprep.subr.mxu0 0.0
        %1320 = vmatpush1.msra.mxu0 0.0
        %1321 = vmatprep.subr.mxu0 0.0
        %1322 = vmatpush1.msra.mxu0 0.0
        %1323 = vmatprep.subr.mxu0 0.0
        %1324 = vmatpush1.msra.mxu0 0.0
        %1325 = vmatprep.subr.mxu0 0.0
        %1326 = vmatpush1.msra.mxu0 0.0
        %1327 = vmatprep.subr.mxu0 0.0
        %1328 = vmatpush1.msra.mxu0 0.0
        %1329 = vmatprep.subr.mxu0 0.0
        %1330 = vmatpush1.msra.mxu0 0.0
        %1331 = vmatprep.subr.mxu0 0.0
        %1332 = vmatpush1.msra.mxu0 0.0
        %1333 = vmatprep.subr.mxu0 0.0
        %1334 = vmatpush1.msra.mxu0 0.0
        %1335 = vmatprep.subr.mxu0 0.0
        %1336 = vmatpush1.msra.mxu0 0.0
        %1337 = vmatprep.subr.mxu0 0.0
        %1338 = vmatpush1.msra.mxu0 %v646
        %1339 = vmatprep.subr.mxu0 0.0
        %1340 = vmatpush2.msra.mxu0 0.0
        %1341 = vmatprep.subr.mxu0 0.0
        %1342 = vmatpush2.msra.mxu0 0.0
        %1343 = vmatprep.subr.mxu0 0.0
        %1344 = vmatpush2.msra.mxu0 0.0
        %1345 = vmatprep.subr.mxu0 0.0
        %1346 = vmatpush2.msra.mxu0 0.0
        %1347 = vmatprep.subr.mxu0 0.0
        %1348 = vmatpush2.msra.mxu0 0.0
        %1349 = vmatprep.subr.mxu0 0.0
        %1350 = vmatpush2.msra.mxu0 0.0
        %1351 = vmatprep.subr.mxu0 0.0
        %1352 = vmatpush2.msra.mxu0 0.0
        %1353 = vmatprep.subr.mxu0 0.0
        %1354 = vmatpush2.msra.mxu0 0.0
        %1355 = vmatprep.subr.mxu0 0.0
        %1356 = vmatpush2.msra.mxu0 0.0
        %1357 = vmatprep.subr.mxu0 0.0
        %1358 = vmatpush2.msra.mxu0 0.0
        %1359 = vmatprep.subr.mxu0 0.0
        %1360 = vmatpush2.msra.mxu0 0.0
        %1361 = vmatprep.subr.mxu0 0.0
        %1362 = vmatpush2.msra.mxu0 0.0
        %1363 = vmatprep.subr.mxu0 0.0
        %1364 = vmatpush2.msra.mxu0 0.0
        %1365 = vmatprep.subr.mxu0 0.0
        %1366 = vmatpush2.msra.mxu0 0.0
        %1367 = vmatprep.subr.mxu0 0.0
        %1368 = vmatpush2.msra.mxu0 0.0
        %1369 = vmatprep.subr.mxu0 0.0
        %1370 = vmatpush2.msra.mxu0 0.0
        %1371 = vmatprep.mubr.f32.mxu0 0.0
        %1372 = vmatmul.mubr.f32.gmra.mxu0 %v1305
        %v1373 = vpop.f32.mrf.mxu0
        %v1374 = vadd.f32 0.0, %v1373
        %v1375 = vpop.f32.mrf.mxu0
        %1376 = vdwg.mxu0
        %v1377 = vadd.f32 %v1303, %v1374
        %1378 = vst.msk [vmem:[#allocation2] sm:$0xff] %vm521, %v1377
        %1379 = vrot.lane.b32.xlu0 %v643, 104
        %v1380 = vpop.permute.xlu0 %1379
        %1381 = vrot.lane.b32.xlu0 %v640, 72
        %v1382 = vpop.permute.xlu0 %1381
        %v1383 = vsel %vm658, %v1380, 0
        %v1385 = vsel %vm658, %v1382, 0
        %1387 = vmatprep.subr.mxu0 0.0
        %1388 = vmatpush1.xpose.msra.mxu0 0.0
        %1389 = vmatprep.subr.mxu0 0.0
        %1390 = vmatpush1.xpose.msra.mxu0 0.0
        %1391 = vmatprep.subr.mxu0 0.0
        %1392 = vmatpush1.xpose.msra.mxu0 0.0
        %1393 = vmatprep.subr.mxu0 0.0
        %1394 = vmatpush1.xpose.msra.mxu0 0.0
        %1395 = vmatprep.subr.mxu0 0.0
        %1396 = vmatpush1.xpose.msra.mxu0 0.0
        %1397 = vmatprep.subr.mxu0 0.0
        %1398 = vmatpush1.xpose.msra.mxu0 0.0
        %1399 = vmatprep.subr.mxu0 0.0
        %1400 = vmatpush1.xpose.msra.mxu0 0.0
        %1401 = vmatprep.subr.mxu0 0.0
        %1402 = vmatpush1.xpose.msra.mxu0 0.0
        %1403 = vmatprep.subr.mxu0 0.0
        %1404 = vmatpush1.xpose.msra.mxu0 0.0
        %1405 = vmatprep.subr.mxu0 0.0
        %1406 = vmatpush1.xpose.msra.mxu0 0.0
        %1407 = vmatprep.subr.mxu0 0.0
        %1408 = vmatpush1.xpose.msra.mxu0 0.0
        %1409 = vmatprep.subr.mxu0 0.0
        %1410 = vmatpush1.xpose.msra.mxu0 0.0
        %1411 = vmatprep.subr.mxu0 0.0
        %1412 = vmatpush1.xpose.msra.mxu0 0.0
        %1413 = vmatprep.subr.mxu0 0.0
        %1414 = vmatpush1.xpose.msra.mxu0 0.0
        %1415 = vmatprep.subr.mxu0 0.0
        %1416 = vmatpush1.xpose.msra.mxu0 0.0
        %1417 = vmatprep.subr.mxu0 0.0
        %1418 = vmatpush1.xpose.msra.mxu0 %v1385
        %1419 = vmatprep.subr.mxu0 0.0
        %1420 = vmatpush2.xpose.msra.mxu0 0.0
        %1421 = vmatprep.subr.mxu0 0.0
        %1422 = vmatpush2.xpose.msra.mxu0 0.0
        %1423 = vmatprep.subr.mxu0 0.0
        %1424 = vmatpush2.xpose.msra.mxu0 0.0
        %1425 = vmatprep.subr.mxu0 0.0
        %1426 = vmatpush2.xpose.msra.mxu0 0.0
        %1427 = vmatprep.subr.mxu0 0.0
        %1428 = vmatpush2.xpose.msra.mxu0 0.0
        %1429 = vmatprep.subr.mxu0 0.0
        %1430 = vmatpush2.xpose.msra.mxu0 0.0
        %1431 = vmatprep.subr.mxu0 0.0
        %1432 = vmatpush2.xpose.msra.mxu0 0.0
        %1433 = vmatprep.subr.mxu0 0.0
        %1434 = vmatpush2.xpose.msra.mxu0 0.0
        %1435 = vmatprep.subr.mxu0 0.0
        %1436 = vmatpush2.xpose.msra.mxu0 0.0
        %1437 = vmatprep.subr.mxu0 0.0
        %1438 = vmatpush2.xpose.msra.mxu0 0.0
        %1439 = vmatprep.subr.mxu0 0.0
        %1440 = vmatpush2.xpose.msra.mxu0 0.0
        %1441 = vmatprep.subr.mxu0 0.0
        %1442 = vmatpush2.xpose.msra.mxu0 0.0
        %1443 = vmatprep.subr.mxu0 0.0
        %1444 = vmatpush2.xpose.msra.mxu0 0.0
        %1445 = vmatprep.subr.mxu0 0.0
        %1446 = vmatpush2.xpose.msra.mxu0 0.0
        %1447 = vmatprep.subr.mxu0 0.0
        %1448 = vmatpush2.xpose.msra.mxu0 0.0
        %1449 = vmatprep.subr.mxu0 0.0
        %1450 = vmatpush2.xpose.msra.mxu0 0.0
        %1451 = vmatprep.mubr.f32.mxu0 0.0
        %1452 = vmatmul.mubr.f32.gmra.mxu0 %v1383
        %v1453 = vpop.f32.mrf.mxu0
        %v1454 = vadd.f32 %v653, %v1453
        %v1455 = vpop.f32.mrf.mxu0
        %1456 = vdwg.mxu0
        %v1457 = vsel %vm658, %v1454, -inf
        %1458 = vmax.xlane.f32.xlu0 %v1457
        %v1459 = vpop.xlane.xlu0 %1458
        %v1460 = vsub.f32 %v1454, %v1459
        %v1461 = vmul.f32 %v1460, 1.442695
        %v1462 = vpow.pop %v1461
        %v1463 = vsel %vm658, %v1462, 0.0
        %1464 = vadd.xlane.f32.xlu0 %v1463
        %v1465 = vpop.xlane.xlu0 %1464
        %v1466 = vrcp.pop %v1465
        %1467 = vrot.lane.b32.xlu0 %v640, 40
        %v1468 = vpop.permute.xlu0 %1467
        %v1471 = vsel %vm658, %v1462, 0
        %1473 = vmatprep.subr.mxu0 0.0
        %1474 = vmatpush1.msra.mxu0 0.0
        %1475 = vmatprep.subr.mxu0 0.0
        %1476 = vmatpush1.msra.mxu0 0.0
        %1477 = vmatprep.subr.mxu0 0.0
        %1478 = vmatpush1.msra.mxu0 0.0
        %1479 = vmatprep.subr.mxu0 0.0
        %1480 = vmatpush1.msra.mxu0 0.0
        %1481 = vmatprep.subr.mxu0 0.0
        %1482 = vmatpush1.msra.mxu0 0.0
        %1483 = vmatprep.subr.mxu0 0.0
        %1484 = vmatpush1.msra.mxu0 0.0
        %1485 = vmatprep.subr.mxu0 0.0
        %1486 = vmatpush1.msra.mxu0 0.0
        %1487 = vmatprep.subr.mxu0 0.0
        %1488 = vmatpush1.msra.mxu0 0.0
        %1489 = vmatprep.subr.mxu0 0.0
        %1490 = vmatpush1.msra.mxu0 0.0
        %1491 = vmatprep.subr.mxu0 0.0
        %1492 = vmatpush1.msra.mxu0 0.0
        %1493 = vmatprep.subr.mxu0 0.0
        %1494 = vmatpush1.msra.mxu0 0.0
        %1495 = vmatprep.subr.mxu0 0.0
        %1496 = vmatpush1.msra.mxu0 0.0
        %1497 = vmatprep.subr.mxu0 0.0
        %1498 = vmatpush1.msra.mxu0 0.0
        %1499 = vmatprep.subr.mxu0 0.0
        %1500 = vmatpush1.msra.mxu0 0.0
        %1501 = vmatprep.subr.mxu0 0.0
        %1502 = vmatpush1.msra.mxu0 0.0
        %1503 = vmatprep.subr.mxu0 0.0
        %1504 = vmatpush1.msra.mxu0 %v1468
        %1505 = vmatprep.subr.mxu0 0.0
        %1506 = vmatpush2.msra.mxu0 0.0
        %1507 = vmatprep.subr.mxu0 0.0
        %1508 = vmatpush2.msra.mxu0 0.0
        %1509 = vmatprep.subr.mxu0 0.0
        %1510 = vmatpush2.msra.mxu0 0.0
        %1511 = vmatprep.subr.mxu0 0.0
        %1512 = vmatpush2.msra.mxu0 0.0
        %1513 = vmatprep.subr.mxu0 0.0
        %1514 = vmatpush2.msra.mxu0 0.0
        %1515 = vmatprep.subr.mxu0 0.0
        %1516 = vmatpush2.msra.mxu0 0.0
        %1517 = vmatprep.subr.mxu0 0.0
        %1518 = vmatpush2.msra.mxu0 0.0
        %1519 = vmatprep.subr.mxu0 0.0
        %1520 = vmatpush2.msra.mxu0 0.0
        %1521 = vmatprep.subr.mxu0 0.0
        %1522 = vmatpush2.msra.mxu0 0.0
        %1523 = vmatprep.subr.mxu0 0.0
        %1524 = vmatpush2.msra.mxu0 0.0
        %1525 = vmatprep.subr.mxu0 0.0
        %1526 = vmatpush2.msra.mxu0 0.0
        %1527 = vmatprep.subr.mxu0 0.0
        %1528 = vmatpush2.msra.mxu0 0.0
        %1529 = vmatprep.subr.mxu0 0.0
        %1530 = vmatpush2.msra.mxu0 0.0
        %1531 = vmatprep.subr.mxu0 0.0
        %1532 = vmatpush2.msra.mxu0 0.0
        %1533 = vmatprep.subr.mxu0 0.0
        %1534 = vmatpush2.msra.mxu0 0.0
        %1535 = vmatprep.subr.mxu0 0.0
        %1536 = vmatpush2.msra.mxu0 0.0
        %1537 = vmatprep.mubr.f32.mxu0 0.0
        %1538 = vmatmul.mubr.f32.gmra.mxu0 %v1471
        %v1539 = vpop.f32.mrf.mxu0
        %v1540 = vadd.f32 0.0, %v1539
        %v1541 = vpop.f32.mrf.mxu0
        %1542 = vdwg.mxu0
        %v1543 = vmul.f32 %v1540, %v1466
        %v1544 = vld [vmem:[#allocation2] sm:$0xff]
        %v1546 = vsel %vm658, %v1543, 0
        %1548 = vmatprep.subr.mxu0 0.0
        %1549 = vmatpush1.msra.mxu0 0.0
        %1550 = vmatprep.subr.mxu0 0.0
        %1551 = vmatpush1.msra.mxu0 0.0
        %1552 = vmatprep.subr.mxu0 0.0
        %1553 = vmatpush1.msra.mxu0 0.0
        %1554 = vmatprep.subr.mxu0 0.0
        %1555 = vmatpush1.msra.mxu0 0.0
        %1556 = vmatprep.subr.mxu0 0.0
        %1557 = vmatpush1.msra.mxu0 0.0
        %1558 = vmatprep.subr.mxu0 0.0
        %1559 = vmatpush1.msra.mxu0 0.0
        %1560 = vmatprep.subr.mxu0 0.0
        %1561 = vmatpush1.msra.mxu0 0.0
        %1562 = vmatprep.subr.mxu0 0.0
        %1563 = vmatpush1.msra.mxu0 0.0
        %1564 = vmatprep.subr.mxu0 0.0
        %1565 = vmatpush1.msra.mxu0 0.0
        %1566 = vmatprep.subr.mxu0 0.0
        %1567 = vmatpush1.msra.mxu0 0.0
        %1568 = vmatprep.subr.mxu0 0.0
        %1569 = vmatpush1.msra.mxu0 0.0
        %1570 = vmatprep.subr.mxu0 0.0
        %1571 = vmatpush1.msra.mxu0 0.0
        %1572 = vmatprep.subr.mxu0 0.0
        %1573 = vmatpush1.msra.mxu0 0.0
        %1574 = vmatprep.subr.mxu0 0.0
        %1575 = vmatpush1.msra.mxu0 0.0
        %1576 = vmatprep.subr.mxu0 0.0
        %1577 = vmatpush1.msra.mxu0 0.0
        %1578 = vmatprep.subr.mxu0 0.0
        %1579 = vmatpush1.msra.mxu0 %v647
        %1580 = vmatprep.subr.mxu0 0.0
        %1581 = vmatpush2.msra.mxu0 0.0
        %1582 = vmatprep.subr.mxu0 0.0
        %1583 = vmatpush2.msra.mxu0 0.0
        %1584 = vmatprep.subr.mxu0 0.0
        %1585 = vmatpush2.msra.mxu0 0.0
        %1586 = vmatprep.subr.mxu0 0.0
        %1587 = vmatpush2.msra.mxu0 0.0
        %1588 = vmatprep.subr.mxu0 0.0
        %1589 = vmatpush2.msra.mxu0 0.0
        %1590 = vmatprep.subr.mxu0 0.0
        %1591 = vmatpush2.msra.mxu0 0.0
        %1592 = vmatprep.subr.mxu0 0.0
        %1593 = vmatpush2.msra.mxu0 0.0
        %1594 = vmatprep.subr.mxu0 0.0
        %1595 = vmatpush2.msra.mxu0 0.0
        %1596 = vmatprep.subr.mxu0 0.0
        %1597 = vmatpush2.msra.mxu0 0.0
        %1598 = vmatprep.subr.mxu0 0.0
        %1599 = vmatpush2.msra.mxu0 0.0
        %1600 = vmatprep.subr.mxu0 0.0
        %1601 = vmatpush2.msra.mxu0 0.0
        %1602 = vmatprep.subr.mxu0 0.0
        %1603 = vmatpush2.msra.mxu0 0.0
        %1604 = vmatprep.subr.mxu0 0.0
        %1605 = vmatpush2.msra.mxu0 0.0
        %1606 = vmatprep.subr.mxu0 0.0
        %1607 = vmatpush2.msra.mxu0 0.0
        %1608 = vmatprep.subr.mxu0 0.0
        %1609 = vmatpush2.msra.mxu0 0.0
        %1610 = vmatprep.subr.mxu0 0.0
        %1611 = vmatpush2.msra.mxu0 0.0
        %1612 = vmatprep.mubr.f32.mxu0 0.0
        %1613 = vmatmul.mubr.f32.gmra.mxu0 %v1546
        %v1614 = vpop.f32.mrf.mxu0
        %v1615 = vadd.f32 0.0, %v1614
        %v1616 = vpop.f32.mrf.mxu0
        %1617 = vdwg.mxu0
        %v1618 = vadd.f32 %v1544, %v1615
        %1619 = vst.msk [vmem:[#allocation2] sm:$0xff] %vm521, %v1618
        %v1620 = vld [vmem:[#allocation2] sm:$0xff]
        %v1621 = vadd.f32 %v517, %v1620
        %v1622 = vld [vmem:[%s5] sm:$0x1]
        %v1624 = vlaneseq
        %v1625 = vshrl.u32 %v1624, 7
        %v1626 = vsub.s32 0, %v1625
        %v1627 = vrot.slane %v1622, %v1626
        %v1629 = vadd.f32 %v1621, %v1627
        %v1630 = vld [vmem:[%s8] sm:$0x1]
        %v1631 = vld [vmem:[%s9] sm:$0x1]
        %v1632 = vsel %vm521, %v1629, 0.0
        %1633 = vadd.xlane.f32.xlu0 %v1632
        %v1634 = vpop.xlane.xlu0 %1633
        %v1635 = vmul.f32 %v1629, %v1629
        %v1636 = vsel %vm521, %v1635, 0.0
        %1637 = vadd.xlane.f32.xlu0 %v1636
        %v1638 = vpop.xlane.xlu0 %1637
        %v1639 = vmul.f32 %v1634, 0.03125
        %v1640 = vmul.f32 %v1634, %v1639
        %v1641 = vsub.f32 %v1638, %v1640
        %v1642 = vmax.f32 %v1641, 0.0
        %v1643 = vmul.f32 %v1642, 0.032258064
        %v1644 = vrsqrt.pop %v1643
        %v1645 = vmul.f32 %v1643, %v1644
        %vm1646 = vcmp.eq.f32.partialorder %v1643, inf
        %v1647 = vsel %vm1646, %v1643, %v1645
        %vm1648 = vcmp.eq.f32.partialorder %v1643, 0.0
        %v1649 = vand.u32 %v1643, 2147483648
        %v1650 = vsel %vm1648, %v1649, %v1647
        %v1651 = vadd.f32 %v1650, 1e-06
        %v1652 = vrcp.pop %v1651
        %v1653 = vsub.f32 %v1629, %v1639
        %v1654 = vmul.f32 %v1653, %v1652
        %v1656 = vlaneseq
        %v1657 = vshrl.u32 %v1656, 7
        %v1658 = vsub.s32 0, %v1657
        %v1659 = vrot.slane %v1630, %v1658
        %v1661 = vmul.f32 %v1659, %v1654
        %v1663 = vlaneseq
        %v1664 = vshrl.u32 %v1663, 7
        %v1665 = vsub.s32 0, %v1664
        %v1666 = vrot.slane %v1631, %v1665
        %v1668 = vadd.f32 %v1661, %v1666
        %v1669 = vld [vmem:[%s10] sm:$0xff]
        %v1670 = vld [vmem:[%s10 + $0x8] sm:$0xff]
        %v1671 = vld [vmem:[%s10 + $0x10] sm:$0xff]
        %v1672 = vld [vmem:[%s10 + $0x18] sm:$0xff]
        %v1673 = vld [vmem:[%s11] sm:$0x1]
        %v1675 = vlaneseq
        %v1676 = vshrl.u32 %v1675, 7
        %v1677 = vsub.s32 0, %v1676
        %v1678 = vrot.slane %v1673, %v1677
        %v1681 = vsel %vm521, %v1668, 0
        %1683 = vmatprep.subr.mxu0 0.0
        %1684 = vmatpush1.msra.mxu0 0.0
        %1685 = vmatprep.subr.mxu0 0.0
        %1686 = vmatpush1.msra.mxu0 0.0
        %1687 = vmatprep.subr.mxu0 0.0
        %1688 = vmatpush1.msra.mxu0 0.0
        %1689 = vmatprep.subr.mxu0 0.0
        %1690 = vmatpush1.msra.mxu0 0.0
        %1691 = vmatprep.subr.mxu0 0.0
        %1692 = vmatpush1.msra.mxu0 0.0
        %1693 = vmatprep.subr.mxu0 0.0
        %1694 = vmatpush1.msra.mxu0 0.0
        %1695 = vmatprep.subr.mxu0 0.0
        %1696 = vmatpush1.msra.mxu0 0.0
        %1697 = vmatprep.subr.mxu0 0.0
        %1698 = vmatpush1.msra.mxu0 0.0
        %1699 = vmatprep.subr.mxu0 0.0
        %1700 = vmatpush1.msra.mxu0 0.0
        %1701 = vmatprep.subr.mxu0 0.0
        %1702 = vmatpush1.msra.mxu0 0.0
        %1703 = vmatprep.subr.mxu0 0.0
        %1704 = vmatpush1.msra.mxu0 0.0
        %1705 = vmatprep.subr.mxu0 0.0
        %1706 = vmatpush1.msra.mxu0 0.0
        %1707 = vmatprep.subr.mxu0 0.0
        %1708 = vmatpush1.msra.mxu0 %v1672
        %1709 = vmatprep.subr.mxu0 0.0
        %1710 = vmatpush1.msra.mxu0 %v1671
        %1711 = vmatprep.subr.mxu0 0.0
        %1712 = vmatpush1.msra.mxu0 %v1670
        %1713 = vmatprep.subr.mxu0 0.0
        %1714 = vmatpush1.msra.mxu0 %v1669
        %1715 = vmatprep.subr.mxu0 0.0
        %1716 = vmatpush2.msra.mxu0 0.0
        %1717 = vmatprep.subr.mxu0 0.0
        %1718 = vmatpush2.msra.mxu0 0.0
        %1719 = vmatprep.subr.mxu0 0.0
        %1720 = vmatpush2.msra.mxu0 0.0
        %1721 = vmatprep.subr.mxu0 0.0
        %1722 = vmatpush2.msra.mxu0 0.0
        %1723 = vmatprep.subr.mxu0 0.0
        %1724 = vmatpush2.msra.mxu0 0.0
        %1725 = vmatprep.subr.mxu0 0.0
        %1726 = vmatpush2.msra.mxu0 0.0
        %1727 = vmatprep.subr.mxu0 0.0
        %1728 = vmatpush2.msra.mxu0 0.0
        %1729 = vmatprep.subr.mxu0 0.0
        %1730 = vmatpush2.msra.mxu0 0.0
        %1731 = vmatprep.subr.mxu0 0.0
        %1732 = vmatpush2.msra.mxu0 0.0
        %1733 = vmatprep.subr.mxu0 0.0
        %1734 = vmatpush2.msra.mxu0 0.0
        %1735 = vmatprep.subr.mxu0 0.0
        %1736 = vmatpush2.msra.mxu0 0.0
        %1737 = vmatprep.subr.mxu0 0.0
        %1738 = vmatpush2.msra.mxu0 0.0
        %1739 = vmatprep.subr.mxu0 0.0
        %1740 = vmatpush2.msra.mxu0 0.0
        %1741 = vmatprep.subr.mxu0 0.0
        %1742 = vmatpush2.msra.mxu0 0.0
        %1743 = vmatprep.subr.mxu0 0.0
        %1744 = vmatpush2.msra.mxu0 0.0
        %1745 = vmatprep.subr.mxu0 0.0
        %1746 = vmatpush2.msra.mxu0 0.0
        %1747 = vmatprep.mubr.f32.mxu0 0.0
        %1748 = vmatmul.mubr.f32.gmra.mxu0 %v1681
        %v1749 = vpop.f32.mrf.mxu0
        %v1750 = vadd.f32 %v1678, %v1749
        %v1751 = vpop.f32.mrf.mxu0
        %1752 = vdwg.mxu0
        %v1753 = vmax.f32 %v1750, 0.0
        %v1754 = vld [vmem:[%s12] sm:$0xff]
        %v1755 = vld [vmem:[%s12 + $0x8] sm:$0xff]
        %v1756 = vld [vmem:[%s12 + $0x10] sm:$0xff]
        %v1757 = vld [vmem:[%s12 + $0x18] sm:$0xff]
        %v1758 = vld [vmem:[%s12 + $0x20] sm:$0xff]
        %v1759 = vld [vmem:[%s12 + $0x28] sm:$0xff]
        %v1760 = vld [vmem:[%s12 + $0x30] sm:$0xff]
        %v1761 = vld [vmem:[%s12 + $0x38] sm:$0xff]
        %v1762 = vld [vmem:[%s13] sm:$0x1]
        %v1764 = vlaneseq
        %v1765 = vshrl.u32 %v1764, 7
        %v1766 = vsub.s32 0, %v1765
        %v1767 = vrot.slane %v1762, %v1766
        %vm1769 = vcmask 523264
        %v1771 = vsel %vm1769, %v1753, 0
        %1773 = vmatprep.subr.mxu0 0.0
        %1774 = vmatpush1.msra.mxu0 0.0
        %1775 = vmatprep.subr.mxu0 0.0
        %1776 = vmatpush1.msra.mxu0 0.0
        %1777 = vmatprep.subr.mxu0 0.0
        %1778 = vmatpush1.msra.mxu0 0.0
        %1779 = vmatprep.subr.mxu0 0.0
        %1780 = vmatpush1.msra.mxu0 0.0
        %1781 = vmatprep.subr.mxu0 0.0
        %1782 = vmatpush1.msra.mxu0 0.0
        %1783 = vmatprep.subr.mxu0 0.0
        %1784 = vmatpush1.msra.mxu0 0.0
        %1785 = vmatprep.subr.mxu0 0.0
        %1786 = vmatpush1.msra.mxu0 0.0
        %1787 = vmatprep.subr.mxu0 0.0
        %1788 = vmatpush1.msra.mxu0 0.0
        %1789 = vmatprep.subr.mxu0 0.0
        %1790 = vmatpush1.msra.mxu0 %v1761
        %1791 = vmatprep.subr.mxu0 0.0
        %1792 = vmatpush1.msra.mxu0 %v1760
        %1793 = vmatprep.subr.mxu0 0.0
        %1794 = vmatpush1.msra.mxu0 %v1759
        %1795 = vmatprep.subr.mxu0 0.0
        %1796 = vmatpush1.msra.mxu0 %v1758
        %1797 = vmatprep.subr.mxu0 0.0
        %1798 = vmatpush1.msra.mxu0 %v1757
        %1799 = vmatprep.subr.mxu0 0.0
        %1800 = vmatpush1.msra.mxu0 %v1756
        %1801 = vmatprep.subr.mxu0 0.0
        %1802 = vmatpush1.msra.mxu0 %v1755
        %1803 = vmatprep.subr.mxu0 0.0
        %1804 = vmatpush1.msra.mxu0 %v1754
        %1805 = vmatprep.subr.mxu0 0.0
        %1806 = vmatpush2.msra.mxu0 0.0
        %1807 = vmatprep.subr.mxu0 0.0
        %1808 = vmatpush2.msra.mxu0 0.0
        %1809 = vmatprep.subr.mxu0 0.0
        %1810 = vmatpush2.msra.mxu0 0.0
        %1811 = vmatprep.subr.mxu0 0.0
        %1812 = vmatpush2.msra.mxu0 0.0
        %1813 = vmatprep.subr.mxu0 0.0
        %1814 = vmatpush2.msra.mxu0 0.0
        %1815 = vmatprep.subr.mxu0 0.0
        %1816 = vmatpush2.msra.mxu0 0.0
        %1817 = vmatprep.subr.mxu0 0.0
        %1818 = vmatpush2.msra.mxu0 0.0
        %1819 = vmatprep.subr.mxu0 0.0
        %1820 = vmatpush2.msra.mxu0 0.0
        %1821 = vmatprep.subr.mxu0 0.0
        %1822 = vmatpush2.msra.mxu0 0.0
        %1823 = vmatprep.subr.mxu0 0.0
        %1824 = vmatpush2.msra.mxu0 0.0
        %1825 = vmatprep.subr.mxu0 0.0
        %1826 = vmatpush2.msra.mxu0 0.0
        %1827 = vmatprep.subr.mxu0 0.0
        %1828 = vmatpush2.msra.mxu0 0.0
        %1829 = vmatprep.subr.mxu0 0.0
        %1830 = vmatpush2.msra.mxu0 0.0
        %1831 = vmatprep.subr.mxu0 0.0
        %1832 = vmatpush2.msra.mxu0 0.0
        %1833 = vmatprep.subr.mxu0 0.0
        %1834 = vmatpush2.msra.mxu0 0.0
        %1835 = vmatprep.subr.mxu0 0.0
        %1836 = vmatpush2.msra.mxu0 0.0
        %1837 = vmatprep.mubr.f32.mxu0 0.0
        %1838 = vmatmul.mubr.f32.gmra.mxu0 %v1771
        %v1839 = vpop.f32.mrf.mxu0
        %v1840 = vadd.f32 %v1767, %v1839
        %v1841 = vpop.f32.mrf.mxu0
        %1842 = vdwg.mxu0
        %v1843 = vadd.f32 %v1629, %v1840
        %1844 = vst.msk [vmem:[%s516] sm:$0xff] %vm521, %v1843
        %s1845 = sand.u32 %s346, 1
        %s1846 = scalar_lea.sflag [#allocation5], %s1845
        %s1847 = sand.u32 %s346, 1
        %s1848 = smul.addr %s1847, 8
        %s1849 = scalar_lea.vmem [#allocation8], %s1848
        // Predicated region
        $region85: #{tpu_custom_call.1} parent=75 // pred_check
          %p1850 = pneg %p356
        $region86: #{tpu_custom_call.1} parent=75 // pred_check_branch
          %1852 = sbr.rel (%p1850) target = $region88
        $region87: #{tpu_custom_call.1} parent=75 // pred_region
          %s1854 = ssub.s32 128, 128
          %1855 = vsyncadd %s1846, %s1854
          %s1856 = smul.addr %s34, 128
          %s1857 = scalar_lea.hbm %s14, %s1856
          %s1859 = sshll.u32 %s1849, 4
          %s1860 = int_to_ptr.vmem [resolvable:$true] %s1859
          %1862 = dma.vmem_to_hbm [thread:$0]  %s1860, 128, %s1857, %s1846
        $region88: #{tpu_custom_call.1} parent=75 // pred_fallthru
          _
      $region76: #{tpu_custom_call.1} parent=5 // pred_fallthru
        _
      %p1863 = scmp.le.s32.totalorder 2, %s29
      // Predicated region
      $region89: #{tpu_custom_call.1} parent=5 // pred_check
        %p1864 = pneg %p1863
      $region90: #{tpu_custom_call.1} parent=5 // pred_check_branch
        %1866 = sbr.rel (%p1864) target = $region92
      $region91: #{tpu_custom_call.1} parent=5 // pred_region
        %s1867 = ssub.s32 %s29, 2
        // Predicated region
        $region93: #{tpu_custom_call.1} parent=91 // pred_check
          %p1868 = pneg %p362
        $region94: #{tpu_custom_call.1} parent=91 // pred_check_branch
          %1870 = sbr.rel (%p1868) target = $region96
        $region95: #{tpu_custom_call.1} parent=91 // pred_region
          %s1871 = sand.u32 %s347, 1
          %s1872 = scalar_lea.sflag [#allocation5], %s1871
          %s1873 = sand.u32 %s347, 1
          %s1874 = smul.addr %s1873, 8
          %s1875 = scalar_lea.vmem [#allocation8], %s1874
          %1876 = dma.done %s1872, 128
        $region96: #{tpu_custom_call.1} parent=91 // pred_fallthru
          _
      $region92: #{tpu_custom_call.1} parent=5 // pred_fallthru
        _
    $region6: #{tpu_custom_call.1} parent=1 // loop_footer
      %s33 = sadd.s32 1, %s29
    $region7: #{tpu_custom_call.1} parent=1 // loop_footer_branch
      %28 = sbr.rel target = $region3
    $region8: #{tpu_custom_call.1} parent=1 // loop_exit
      _
    %1877 = vsyncpa [#allocation4], 1
    %s1878 = scalar_lea.sflag [#allocation4], 1
    %1879 = vsyncpa %s1878, 1
    %1880 = vsyncpa [#allocation7], 1
    %s1881 = scalar_lea.sflag [#allocation7], 1
    %1882 = vsyncpa %s1881, 1
    %1883 = vsyncpa [#allocation5], 1
    %s1884 = scalar_lea.sflag [#allocation5], 1
    %1885 = vsyncpa %s1884, 1

</llo_original>
